<compile_context>
chip_gen: v7x
topology: tpu7x:2x2x1
jax: 0.10.0
libtpu: 0.0.40
codegen_flags: <defaults>
</compile_context>

<pallas_src>
import numpy as np

import jax
import jax.numpy as jnp
from jax.experimental import pallas as pl
from jax.experimental.pallas import tpu as pltpu


def _round_up(x, m):
    return ((x + m - 1) // m) * m


def _make_kernel(Bblk, L, kmax):
    """Fused: transform -> (all filters, all taps) conv matmul -> ReLU -> masked max-pool."""

    def kernel(x_ref, m_ref, wt_ref, bt_ref, wc_ref, bc_ref, lim_ref, o_ref):
        M = Bblk * L
        x = x_ref[...].reshape(M, -1)                                   # (M, X) bf16
        m = m_ref[...].reshape(M, 1).astype(jnp.float32)                # (M, 1)

        # sentence_transform Linear; masked_fill folded as (x @ W) * mask + b
        # (identical to (x*mask) @ W + b since mask is per-row 0/1). Dropout = eval identity.
        h = jnp.dot(x, wt_ref[...], preferred_element_type=jnp.float32) * m + bt_ref[...]

        # All Conv1d filters AND taps fused into ONE MXU matmul: K = kmax * H_pad.
        # Row i of tap j is h[(i + j) % M]; wrap-around rows land in the masked tail.
        parts = [h] + [pltpu.roll(h, shift=M - j, axis=0) for j in range(1, kmax)]
        h_cat = jnp.concatenate(parts, axis=-1).astype(jnp.bfloat16)    # (M, kmax*H_pad)
        acc = jnp.dot(h_cat, wc_ref[...], preferred_element_type=jnp.float32)
        acc = jnp.maximum(acc + bc_ref[...], 0.0)                       # (M, NF_pad) f32

        # Pooling mask built in-kernel: position p is a valid conv-output row for a
        # feature column with filter size k iff p < max_len - k + 1 (the limits vector).
        # Length padding, per-filter tail and roll wrap-around all fall outside.
        NFp = acc.shape[-1]
        pos = jax.lax.broadcasted_iota(jnp.int32, (L, NFp), 0)          # row within example
        valid = (pos < lim_ref[...])[None]                              # (1, L, NFp)
        acc3 = jnp.where(valid, acc.reshape(Bblk, L, NFp), -1e30)

        # Global max-pool over sequence positions; lane-dense (NF_pad) store.
        o_ref[...] = jnp.max(acc3, axis=1)[None].astype(o_ref.dtype)

    return kernel


def preprocess(params, xlnet_token, xlnet_segment):
    """XlnetEncodingNetwork glue: encoder stub + segment/sentence mask + traced max_len."""
    # TODO(synk): the XLNet transformer backbone is an external module passed into
    # __init__; stubbed here with a deterministic embedding lookup producing
    # encoder_layer of shape (B, S, xlnet_size).
    encoder_layer = params["embed"][xlnet_token]                           # (B, S, X)

    B, S = xlnet_segment.shape
    max_segment_pos = jnp.argmax(xlnet_segment, axis=-1)[:, None]          # (B, 1)
    segment_mask = jnp.arange(S)[None, :] <= max_segment_pos               # (B, S)
    sentence_mask = segment_mask & (xlnet_segment == 0)
    # Traced (no host sync / per-length recompile); only feeds the pooling limits.
    max_len = jnp.max(sentence_mask.astype(jnp.int32).sum(axis=1))
    return encoder_layer, sentence_mask.astype(jnp.float32)[:, :, None], max_len


def xlnet_cnn_forward(params, xlnet_token, xlnet_segment, *,
                      batch_block=32, len_bucket=16, mxu_pad=256):
    sentence, mask, max_len = preprocess(params, xlnet_token, xlnet_segment)
    B, S, X = sentence.shape
    H = params["wt"].shape[1]
    filter_sizes = tuple(int(w.shape[0]) for w, _ in params["conv"])
    F = int(params["conv"][0][0].shape[-1])
    NF = len(filter_sizes) * F
    kmax = max(filter_sizes)

    # MXU-width padding of the matmul N/K dims (256 for v6e/v7x; 128 suffices on v5e).
    H_pad = _round_up(H, mxu_pad)
    NF_pad = _round_up(max(NF, 128), mxu_pad)

    # Fixed L: always pad to S (bucketed to 16 for bf16 sublane packing) -> no host
    # sync and a single compiled shape. Valid conv windows are selected via limits.
    L = _round_up(max(S, kmax), len_bucket)

    # PyTorch Conv1d would error if max_len < kmax; clamp instead (bias-only rows).
    max_len = jnp.maximum(max_len, kmax)

    # Batch blocking: big M = Bblk*L per step, but keep G >= 2 whenever B > 1 so the
    # "parallel" axis can split across v7x's two TensorCores.
    Bblk = max(1, min(int(batch_block), (B + 1) // 2 if B > 1 else 1))
    B_pad = _round_up(B, Bblk)
    G = B_pad // Bblk

    x_bf = jnp.pad(sentence, ((0, B_pad - B), (0, L - S), (0, 0))).astype(jnp.bfloat16)
    m_bf = jnp.pad(mask, ((0, B_pad - B), (0, L - S), (0, 0))).astype(jnp.bfloat16)

    wt = jnp.zeros((X, H_pad), jnp.bfloat16).at[:, :H].set(params["wt"].astype(jnp.bfloat16))
    bt = jnp.zeros((1, H_pad), jnp.float32).at[:, :H].set(params["bt"].astype(jnp.float32))

    # Merge all Conv1d filters into one (kmax*H_pad, NF_pad) weight (zero-padded taps
    # for shorter filters) + concatenated bias; features come out already concatenated.
    wconv = jnp.zeros((kmax, H_pad, NF_pad), jnp.float32)
    bconv = jnp.zeros((1, NF_pad), jnp.float32)
    for idx, (wk, bk) in enumerate(params["conv"]):
        k = int(wk.shape[0])
        wconv = wconv.at[:k, :H, idx * F:(idx + 1) * F].set(wk.astype(jnp.float32))
        bconv = bconv.at[:, idx * F:(idx + 1) * F].set(bk.astype(jnp.float32))
    wconv2d = wconv.reshape(kmax * H_pad, NF_pad).astype(jnp.bfloat16)

    # Per-feature valid-window limit (max_len - k + 1); padded feature columns are
    # never masked (their weights/bias are zero, so they pool to exactly 0).
    ks = np.repeat(np.asarray(filter_sizes, np.int32), F)                       # (NF,)
    limits = jnp.full((1, NF_pad), L, jnp.int32)
    limits = limits.at[0, :NF].set((max_len + 1 - jnp.asarray(ks)).astype(jnp.int32))

    kernel = _make_kernel(Bblk, L, kmax)

    # TODO(synk): on v7x, additionally single-buffer the constant-index weight specs
    # (pipeline_mode=pl.Buffered(1)) and halve Bblk to fit the 64 MiB VMEM budget.
    pooled = pl.pallas_call(
        kernel,
        out_shape=jax.ShapeDtypeStruct((G, Bblk, NF_pad), jnp.float32),
        grid_spec=pltpu.PrefetchScalarGridSpec(
            num_scalar_prefetch=0,
            grid=(G,),
            in_specs=[
                pl.BlockSpec((Bblk, L, X), lambda b: (b, 0, 0)),        # sentence (bf16)
                pl.BlockSpec((Bblk, L, 1), lambda b: (b, 0, 0)),        # sentence mask (bf16)
                pl.BlockSpec((X, H_pad), lambda b: (0, 0)),             # transform W (bf16)
                pl.BlockSpec((1, H_pad), lambda b: (0, 0)),             # transform b (f32)
                pl.BlockSpec((kmax * H_pad, NF_pad), lambda b: (0, 0)), # merged conv W (bf16)
                pl.BlockSpec((1, NF_pad), lambda b: (0, 0)),            # merged conv b (f32)
                pl.BlockSpec((1, NF_pad), lambda b: (0, 0)),            # valid-window limits
            ],
            out_specs=pl.BlockSpec((1, Bblk, NF_pad), lambda b: (b, 0, 0)),
        ),
        compiler_params=pltpu.CompilerParams(
            dimension_semantics=("parallel",),
            vmem_limit_bytes=64 * 1024 * 1024,
        ),
    )(x_bf, m_bf, wt, bt, wconv2d, bconv, limits)

    # Final (bias-free) Linear: one well-shaped GEMM in XLA, outside the kernel, so the
    # kernel store stays lane-dense instead of lane-4 masked partial stores.
    pooled = pooled.reshape(B_pad, NF_pad)[:B, :NF]
    return jnp.dot(pooled, params["wlin"].astype(jnp.float32),
                   precision=jax.lax.Precision.HIGHEST)


def reference(params, sentence, mask):
    """Pure-JAX reference of the PyTorch forward (eval mode), with the same bf16
    quantization of matmul operands as the kernel."""
    f32, bf16 = jnp.float32, jnp.bfloat16
    q = lambda a: a.astype(bf16).astype(f32)
    x = q(sentence) * mask.astype(f32)                                  # masked_fill
    h = jnp.einsum("blx,xh->blh", x, q(params["wt"])) + params["bt"].astype(f32)
    h = q(h)                                                            # kernel feeds bf16 h to conv
    feats = []
    for wk, bk in params["conv"]:
        k = wk.shape[0]
        Lk = h.shape[1] - k + 1
        acc = sum(jnp.einsum("blh,hf->blf", h[:, j:j + Lk, :], q(wk[j])) for j in range(k))
        acc = jnp.maximum(acc + bk.astype(f32), 0.0)
        feats.append(acc.max(axis=1))
    feat = jnp.concatenate(feats, axis=-1)
    return jnp.dot(feat, params["wlin"].astype(f32), precision=jax.lax.Precision.HIGHEST)


if __name__ == "__main__":
    # Small, module-consistent shapes.
    B, S = 5, 16
    vocab = 50
    xlnet_size = 32      # xlnet_size
    cnn_size = 32        # hidden size of sentence_transform
    filter_nums = 16
    filter_sizes = (2, 3)
    num_categories = 4

    key = jax.random.PRNGKey(0)
    keys = jax.random.split(key, 10)

    params = {
        "embed": 0.1 * jax.random.normal(keys[0], (vocab, xlnet_size), jnp.float32),
        "wt": 0.1 * jax.random.normal(keys[1], (xlnet_size, cnn_size), jnp.float32),
        "bt": 0.1 * jax.random.normal(keys[2], (1, cnn_size), jnp.float32),
        "conv": [],
        "wlin": 0.1 * jax.random.normal(
            keys[3], (filter_nums * len(filter_sizes), num_categories), jnp.float32),
    }
    for i, k in enumerate(filter_sizes):
        wk = 0.1 * jax.random.normal(keys[4 + 2 * i], (k, cnn_size, filter_nums), jnp.float32)
        bk = 0.1 * jax.random.normal(keys[5 + 2 * i], (1, filter_nums), jnp.float32)
        params["conv"].append((wk, bk))

    xlnet_token = jax.random.randint(keys[8], (B, S), 0, vocab, dtype=jnp.int32)
    # segment ids: 0 for the sentence part, 1 afterwards (per-row sentence lengths).
    sent_lens = [9, 6, 12, 4, 7]
    xlnet_segment = jnp.array(
        [[0] * n + [1] * (S - n) for n in sent_lens], dtype=jnp.int32)

    out = xlnet_cnn_forward(params, xlnet_token, xlnet_segment)
    out = jax.block_until_ready(out)

    # Reference check (host slice to the dynamic max_len is fine in the test harness).
    sentence, mask, max_len = preprocess(params, xlnet_token, xlnet_segment)
    ml = max(int(max_len), max(filter_sizes))
    ref = reference(params, sentence[:, :ml], mask[:, :ml])

    assert out.shape == (B, num_categories), out.shape
    err = float(jnp.max(jnp.abs(out - ref)))
    assert jnp.allclose(out, ref, atol=3e-3, rtol=3e-3), (err, out, ref)

    print("KERNEL_OK")
</pallas_src>

<mosaic_0001>
module attributes {stable_mosaic.version = 11 : i64} {
  func.func @kernel(%arg0: i32, %arg1: memref<3x16x32xbf16, #tpu.memory_space<vmem>>, %arg2: memref<3x16x1xbf16, #tpu.memory_space<vmem>>, %arg3: memref<32x256xbf16, #tpu.memory_space<vmem>>, %arg4: memref<1x256xf32, #tpu.memory_space<vmem>>, %arg5: memref<768x256xbf16, #tpu.memory_space<vmem>>, %arg6: memref<1x256xf32, #tpu.memory_space<vmem>>, %arg7: memref<1x256xi32, #tpu.memory_space<vmem>>, %arg8: memref<1x3x256xf32, #tpu.memory_space<vmem>>) attributes {dimension_semantics = [#tpu.dimension_semantics<parallel>], iteration_bounds = array<i64: 2>, scalar_prefetch = 0 : i64, scratch_operands = 0 : i64, tpu.core_type = #tpu.core_type<tc>, window_params = [{transform_indices = @transform_0, window_bounds = array<i64: 3, 16, 32>}, {transform_indices = @transform_1, window_bounds = array<i64: 3, 16, 1>}, {pipeline_mode = #tpu.pipeline_mode<synchronous>, transform_indices = @transform_2, window_bounds = array<i64: 32, 256>}, {pipeline_mode = #tpu.pipeline_mode<synchronous>, transform_indices = @transform_3, window_bounds = array<i64: 1, 256>}, {pipeline_mode = #tpu.pipeline_mode<synchronous>, transform_indices = @transform_4, window_bounds = array<i64: 768, 256>}, {pipeline_mode = #tpu.pipeline_mode<synchronous>, transform_indices = @transform_5, window_bounds = array<i64: 1, 256>}, {pipeline_mode = #tpu.pipeline_mode<synchronous>, transform_indices = @transform_6, window_bounds = array<i64: 1, 256>}, {transform_indices = @transform_7, window_bounds = array<i64: 1, 3, 256>}]} {
    %c0 = arith.constant 0 : index
    %c0_0 = arith.constant 0 : index
    %c0_1 = arith.constant 0 : index
    %0 = vector.load %arg1[%c0, %c0_0, %c0_1] : memref<3x16x32xbf16, #tpu.memory_space<vmem>>, vector<3x16x32xbf16>
    %1 = vector.shape_cast %0 : vector<3x16x32xbf16> to vector<48x32xbf16>
    %c0_2 = arith.constant 0 : index
    %c0_3 = arith.constant 0 : index
    %c0_4 = arith.constant 0 : index
    %2 = vector.load %arg2[%c0_2, %c0_3, %c0_4] : memref<3x16x1xbf16, #tpu.memory_space<vmem>>, vector<3x16x1xbf16>
    %3 = vector.shape_cast %2 : vector<3x16x1xbf16> to vector<48x1xbf16>
    %4 = arith.extf %3 : vector<48x1xbf16> to vector<48x1xf32>
    %c0_5 = arith.constant 0 : index
    %c0_6 = arith.constant 0 : index
    %5 = vector.load %arg3[%c0_5, %c0_6] : memref<32x256xbf16, #tpu.memory_space<vmem>>, vector<32x256xbf16>
    %cst = arith.constant dense<0.000000e+00> : vector<48x256xf32>
    %6 = tpu.matmul %1, %5, %cst {dimension_numbers = #tpu.dot_dimension_numbers<[1], [0], [0], [1], [0, 0, 1, 1], [], []>} : vector<48x32xbf16>, vector<32x256xbf16>, vector<48x256xf32> -> vector<48x256xf32>
    %7 = vector.broadcast %4 : vector<48x1xf32> to vector<48x256xf32>
    %8 = arith.mulf %6, %7 : vector<48x256xf32>
    %c0_7 = arith.constant 0 : index
    %c0_8 = arith.constant 0 : index
    %9 = vector.load %arg4[%c0_7, %c0_8] : memref<1x256xf32, #tpu.memory_space<vmem>>, vector<1x256xf32>
    %10 = vector.broadcast %9 : vector<1x256xf32> to vector<48x256xf32>
    %11 = arith.addf %8, %10 : vector<48x256xf32>
    %c47_i32 = arith.constant 47 : i32
    %12 = tpu.dynamic_rotate %11 by %c47_i32 dim 0 : vector<48x256xf32>, i32 -> vector<48x256xf32>
    %c46_i32 = arith.constant 46 : i32
    %13 = tpu.dynamic_rotate %11 by %c46_i32 dim 0 : vector<48x256xf32>, i32 -> vector<48x256xf32>
    %14 = tpu.concatenate %11, %12, %13 in 1 : vector<48x256xf32>, vector<48x256xf32>, vector<48x256xf32> -> vector<48x768xf32>
    %15 = arith.truncf %14 : vector<48x768xf32> to vector<48x768xbf16>
    %c0_9 = arith.constant 0 : index
    %c0_10 = arith.constant 0 : index
    %16 = vector.load %arg5[%c0_9, %c0_10] : memref<768x256xbf16, #tpu.memory_space<vmem>>, vector<768x256xbf16>
    %cst_11 = arith.constant dense<0.000000e+00> : vector<48x256xf32>
    %17 = tpu.matmul %15, %16, %cst_11 {dimension_numbers = #tpu.dot_dimension_numbers<[1], [0], [0], [1], [0, 0, 1, 1], [], []>} : vector<48x768xbf16>, vector<768x256xbf16>, vector<48x256xf32> -> vector<48x256xf32>
    %c0_12 = arith.constant 0 : index
    %c0_13 = arith.constant 0 : index
    %18 = vector.load %arg6[%c0_12, %c0_13] : memref<1x256xf32, #tpu.memory_space<vmem>>, vector<1x256xf32>
    %19 = vector.broadcast %18 : vector<1x256xf32> to vector<48x256xf32>
    %20 = arith.addf %17, %19 : vector<48x256xf32>
    %cst_14 = arith.constant 0.000000e+00 : f32
    %21 = vector.broadcast %cst_14 : f32 to vector<48x256xf32>
    %22 = arith.maximumf %20, %21 : vector<48x256xf32>
    %23 = tpu.iota {dimensions = array<i32: 0>} : vector<16x256xi32>
    %c0_15 = arith.constant 0 : index
    %c0_16 = arith.constant 0 : index
    %24 = vector.load %arg7[%c0_15, %c0_16] : memref<1x256xi32, #tpu.memory_space<vmem>>, vector<1x256xi32>
    %25 = vector.broadcast %24 : vector<1x256xi32> to vector<16x256xi32>
    %26 = arith.cmpi slt, %23, %25 : vector<16x256xi32>
    %27 = vector.shape_cast %26 : vector<16x256xi1> to vector<1x16x256xi1>
    %28 = vector.shape_cast %22 : vector<48x256xf32> to vector<3x16x256xf32>
    %cst_17 = arith.constant -1.000000e+30 : f32
    %29 = vector.shape_cast %27 : vector<1x16x256xi1> to vector<1x16x256xi1>
    %30 = vector.broadcast %29 : vector<1x16x256xi1> to vector<3x16x256xi1>
    %31 = vector.broadcast %cst_17 : f32 to vector<3x16x256xf32>
    %32 = arith.select %30, %28, %31 : vector<3x16x256xi1>, vector<3x16x256xf32>
    %cst_18 = arith.constant dense<0xFF800000> : vector<3x256xf32>
    %33 = vector.multi_reduction <maximumf>, %32, %cst_18 [1] : vector<3x16x256xf32> to vector<3x256xf32>
    %34 = vector.shape_cast %33 : vector<3x256xf32> to vector<1x3x256xf32>
    %c0_19 = arith.constant 0 : index
    %c0_20 = arith.constant 0 : index
    %c0_21 = arith.constant 0 : index
    %35 = vector.load %arg8[%c0_19, %c0_20, %c0_21] : memref<1x3x256xf32, #tpu.memory_space<vmem>>, vector<1x3x256xf32>
    tpu.vector_store %arg8[%c0_19, %c0_20, %c0_21], %34 {strides = array<i32>} : memref<1x3x256xf32, #tpu.memory_space<vmem>>, vector<1x3x256xf32>,
    return
  }
  func.func @transform_0(%arg0: i32) -> (i32, i32, i32) {
    %c0_i32 = arith.constant 0 : i32
    %c0_i32_0 = arith.constant 0 : i32
    %c0_i32_1 = arith.constant 0 : i32
    return %arg0, %c0_i32, %c0_i32_0 : i32, i32, i32
  }
  func.func @transform_1(%arg0: i32) -> (i32, i32, i32) {
    %c0_i32 = arith.constant 0 : i32
    %c0_i32_0 = arith.constant 0 : i32
    %c0_i32_1 = arith.constant 0 : i32
    return %arg0, %c0_i32, %c0_i32_0 : i32, i32, i32
  }
  func.func @transform_2(%arg0: i32) -> (i32, i32) {
    %c0_i32 = arith.constant 0 : i32
    %c0_i32_0 = arith.constant 0 : i32
    %c0_i32_1 = arith.constant 0 : i32
    return %c0_i32, %c0_i32_0 : i32, i32
  }
  func.func @transform_3(%arg0: i32) -> (i32, i32) {
    %c0_i32 = arith.constant 0 : i32
    %c0_i32_0 = arith.constant 0 : i32
    %c0_i32_1 = arith.constant 0 : i32
    return %c0_i32, %c0_i32_0 : i32, i32
  }
  func.func @transform_4(%arg0: i32) -> (i32, i32) {
    %c0_i32 = arith.constant 0 : i32
    %c0_i32_0 = arith.constant 0 : i32
    %c0_i32_1 = arith.constant 0 : i32
    return %c0_i32, %c0_i32_0 : i32, i32
  }
  func.func @transform_5(%arg0: i32) -> (i32, i32) {
    %c0_i32 = arith.constant 0 : i32
    %c0_i32_0 = arith.constant 0 : i32
    %c0_i32_1 = arith.constant 0 : i32
    return %c0_i32, %c0_i32_0 : i32, i32
  }
  func.func @transform_6(%arg0: i32) -> (i32, i32) {
    %c0_i32 = arith.constant 0 : i32
    %c0_i32_0 = arith.constant 0 : i32
    %c0_i32_1 = arith.constant 0 : i32
    return %c0_i32, %c0_i32_0 : i32, i32
  }
  func.func @transform_7(%arg0: i32) -> (i32, i32, i32) {
    %c0_i32 = arith.constant 0 : i32
    %c0_i32_0 = arith.constant 0 : i32
    %c0_i32_1 = arith.constant 0 : i32
    return %arg0, %c0_i32, %c0_i32_0 : i32, i32, i32
  }
}

</mosaic_0001>

<llo_original>
// kernel: tpu_custom_call.1
$region0: #{tpu_custom_call.1}
  #allocation0 [shape = 'u32[]', space=smem, size = 0x4, offset = 0x4, fixed_abs, tag = 'smem constant byte address 0x4 - core index']
  #allocation1 [shape = 'u32[144,128]{1,0:T(1,128)}', space=vmem, size = 0x12000, scoped, tag = 'internal scratch']
  %s0 = inlined_call_operand.hbm [shape: bf16[6,16,32], index: 0, kind: input, shape index: {}]
  %s1 = inlined_call_operand.hbm [shape: bf16[6,16,1], index: 1, kind: input, shape index: {}]
  %s2 = inlined_call_operand.hbm [shape: bf16[32,256], index: 2, kind: input, shape index: {}]
  %s3 = inlined_call_operand.hbm [shape: f32[1,256], index: 3, kind: input, shape index: {}]
  %s4 = inlined_call_operand.hbm [shape: bf16[768,256], index: 4, kind: input, shape index: {}]
  %s5 = inlined_call_operand.hbm [shape: f32[1,256], index: 5, kind: input, shape index: {}]
  %s6 = inlined_call_operand.hbm [shape: s32[1,256], index: 6, kind: input, shape index: {}]
  %s7 = inlined_call_operand.hbm [shape: f32[2,3,256], index: 7, kind: output, shape index: {}]
  %s8 = sld [smem:[#allocation0]]
  $region89: #{tpu_custom_call.1} parent=0
    _
  %s10 = ssub.s32 1, %s8
  %s11 = scalar_select 0, %s10, %s8
  $region1: #{tpu_custom_call.1} parent=0
    #allocation2 [shape = 'u8[24576]{0}', space=vmem, size = 0x6000, scoped, tag = 'input window, operand 0']
    #allocation3 [shape = 's32[2]{0}', space=sflag, size = 0x8, scoped, tag = 'scoped memory for tpu_custom_call.1']
    #allocation4 [shape = 's32[2]{0}', space=sflag, size = 0x8, scoped, tag = 'scoped memory for tpu_custom_call.1']
    #allocation5 [shape = 'u8[24576]{0}', space=vmem, size = 0x6000, scoped, tag = 'input window, operand 1']
    #allocation6 [shape = 's32[2]{0}', space=sflag, size = 0x8, scoped, tag = 'scoped memory for tpu_custom_call.1']
    #allocation7 [shape = 'u8[16384]{0}', space=vmem, size = 0x4000, scoped, tag = 'input window, operand 2, single buffered']
    #allocation8 [shape = 'u8[1024]{0}', space=vmem, size = 0x400, scoped, tag = 'input window, operand 3, single buffered']
    #allocation9 [shape = 's32[1]{0}', space=sflag, size = 0x4, scoped, tag = 'scoped memory for tpu_custom_call.1']
    #allocation10 [shape = 'u8[393216]{0}', space=vmem, size = 0x60000, scoped, tag = 'input window, operand 4, single buffered']
    #allocation11 [shape = 'u8[1024]{0}', space=vmem, size = 0x400, scoped, tag = 'input window, operand 5, single buffered']
    #allocation12 [shape = 's32[1]{0}', space=sflag, size = 0x4, scoped, tag = 'scoped memory for tpu_custom_call.1']
    #allocation13 [shape = 'u8[1024]{0}', space=vmem, size = 0x400, scoped, tag = 'input window, operand 6, single buffered']
    #allocation14 [shape = 'u8[8192]{0}', space=vmem, size = 0x2000, scoped, tag = 'output window, operand 0']
    %12 = vsyncpa [#allocation3], 0
    %s13 = scalar_lea.sflag [#allocation3], 1
    %14 = vsyncpa %s13, 0
    %15 = vsyncpa [#allocation6], 0
    %s16 = scalar_lea.sflag [#allocation6], 1
    %17 = vsyncpa %s16, 0
    %18 = vsyncpa [#allocation9], 0
    %19 = vsyncpa [#allocation12], 0
    %20 = vsyncpa [#allocation4], 0
    %s21 = scalar_lea.sflag [#allocation4], 1
    %22 = vsyncpa %s21, 0
    loop: start=0, step=1, limit=4
    $region2: #{tpu_custom_call.1} parent=1 // loop_pre_header
      _
    $region3: #{tpu_custom_call.1} parent=1 // loop_header
      %s24 = sphi 0, %s28
      %p25 = scmp.ge.s32.totalorder %s24, 4
      %s34 = sphi 0, %s36
      %s37 = sphi 0, %s34
      %s38 = sphi 0, %s37
      %s54 = sphi 0, %s38
      %s60 = sphi 0, %s62
      %s63 = sphi 0, %s60
      %s64 = sphi 0, %s63
      %s80 = sphi 0, %s64
      %s84 = sphi 0, %s84
      %s86 = sphi 0, %s84
      %s87 = sphi 0, %s86
      %s101 = sphi 0, %s87
      %s105 = sphi 0, %s105
      %s107 = sphi 0, %s105
      %s108 = sphi 0, %s107
      %s122 = sphi 0, %s108
      %s126 = sphi 0, %s126
      %s128 = sphi 0, %s126
      %s129 = sphi 0, %s128
      %s143 = sphi 0, %s129
      %s147 = sphi 0, %s147
      %s149 = sphi 0, %s147
      %s150 = sphi 0, %s149
      %s164 = sphi 0, %s150
      %s168 = sphi 0, %s168
      %s170 = sphi 0, %s168
      %s171 = sphi 0, %s170
      %s185 = sphi 0, %s171
      %s191 = sphi 0, %s193
      %s194 = sphi 0, %s191
      %s195 = sphi 0, %s194
      %s211 = sphi 0, %s195
    $region4: #{tpu_custom_call.1} parent=1 // loop_header_branch
      %27 = sbr.rel (%p25) target = $region8
    $region5: #{tpu_custom_call.1} parent=1 // loop_body
      %s29 = ssub.s32 %s24, 1
      %s30 = ssub.s32 %s24, 2
      %s31 = sadd.s32 %s24, 1
      %s32 = ssub.s32 %s24, %s31
      %p33 = scmp.eq.s32.totalorder %s32, 0
      %s35 = sadd.s32 %s34, 1
      %s36 = scalar_select %p33, %s34, %s35
      %p39 = pneg %p33
      %p40 = scmp.eq.s32.totalorder %s24, 1
      %p41 = por %p39, %p40
      %p42 = scmp.ne.s32.totalorder %s34, %s37
      %p43 = scmp.eq.s32.totalorder %s24, 0
      %p44 = por %p42, %p43
      %p45 = scmp.ne.s32.totalorder %s34, %s37
      %p46 = scmp.eq.s32.totalorder %s29, 1
      %p47 = por %p45, %p46
      %p48 = scmp.ne.s32.totalorder %s37, %s38
      %p49 = scmp.eq.s32.totalorder %s29, 0
      %p50 = por %p48, %p49
      %p51 = scmp.ne.s32.totalorder %s37, %s38
      %p52 = scmp.eq.s32.totalorder %s30, 1
      %p53 = por %p51, %p52
      %p55 = scmp.ne.s32.totalorder %s38, %s54
      %p56 = scmp.eq.s32.totalorder %s30, 0
      %p57 = por %p55, %p56
      %s58 = ssub.s32 %s24, %s31
      %p59 = scmp.eq.s32.totalorder %s58, 0
      %s61 = sadd.s32 %s60, 1
      %s62 = scalar_select %p59, %s60, %s61
      %p65 = pneg %p59
      %p66 = scmp.eq.s32.totalorder %s24, 1
      %p67 = por %p65, %p66
      %p68 = scmp.ne.s32.totalorder %s60, %s63
      %p69 = scmp.eq.s32.totalorder %s24, 0
      %p70 = por %p68, %p69
      %p71 = scmp.ne.s32.totalorder %s60, %s63
      %p72 = scmp.eq.s32.totalorder %s29, 1
      %p73 = por %p71, %p72
      %p74 = scmp.ne.s32.totalorder %s63, %s64
      %p75 = scmp.eq.s32.totalorder %s29, 0
      %p76 = por %p74, %p75
      %p77 = scmp.ne.s32.totalorder %s63, %s64
      %p78 = scmp.eq.s32.totalorder %s30, 1
      %p79 = por %p77, %p78
      %p81 = scmp.ne.s32.totalorder %s64, %s80
      %p82 = scmp.eq.s32.totalorder %s30, 0
      %p83 = por %p81, %p82
      %s85 = sadd.s32 %s84, 1
      %p88 = scmp.eq.s32.totalorder %s24, 1
      %p89 = scmp.ne.s32.totalorder %s84, %s86
      %p90 = scmp.eq.s32.totalorder %s24, 0
      %p91 = por %p89, %p90
      %p92 = scmp.ne.s32.totalorder %s84, %s86
      %p93 = scmp.eq.s32.totalorder %s29, 1
      %p94 = por %p92, %p93
      %p95 = scmp.ne.s32.totalorder %s86, %s87
      %p96 = scmp.eq.s32.totalorder %s29, 0
      %p97 = por %p95, %p96
      %p98 = scmp.ne.s32.totalorder %s86, %s87
      %p99 = scmp.eq.s32.totalorder %s30, 1
      %p100 = por %p98, %p99
      %p102 = scmp.ne.s32.totalorder %s87, %s101
      %p103 = scmp.eq.s32.totalorder %s30, 0
      %p104 = por %p102, %p103
      %s106 = sadd.s32 %s105, 1
      %p109 = scmp.eq.s32.totalorder %s24, 1
      %p110 = scmp.ne.s32.totalorder %s105, %s107
      %p111 = scmp.eq.s32.totalorder %s24, 0
      %p112 = por %p110, %p111
      %p113 = scmp.ne.s32.totalorder %s105, %s107
      %p114 = scmp.eq.s32.totalorder %s29, 1
      %p115 = por %p113, %p114
      %p116 = scmp.ne.s32.totalorder %s107, %s108
      %p117 = scmp.eq.s32.totalorder %s29, 0
      %p118 = por %p116, %p117
      %p119 = scmp.ne.s32.totalorder %s107, %s108
      %p120 = scmp.eq.s32.totalorder %s30, 1
      %p121 = por %p119, %p120
      %p123 = scmp.ne.s32.totalorder %s108, %s122
      %p124 = scmp.eq.s32.totalorder %s30, 0
      %p125 = por %p123, %p124
      %s127 = sadd.s32 %s126, 1
      %p130 = scmp.eq.s32.totalorder %s24, 1
      %p131 = scmp.ne.s32.totalorder %s126, %s128
      %p132 = scmp.eq.s32.totalorder %s24, 0
      %p133 = por %p131, %p132
      %p134 = scmp.ne.s32.totalorder %s126, %s128
      %p135 = scmp.eq.s32.totalorder %s29, 1
      %p136 = por %p134, %p135
      %p137 = scmp.ne.s32.totalorder %s128, %s129
      %p138 = scmp.eq.s32.totalorder %s29, 0
      %p139 = por %p137, %p138
      %p140 = scmp.ne.s32.totalorder %s128, %s129
      %p141 = scmp.eq.s32.totalorder %s30, 1
      %p142 = por %p140, %p141
      %p144 = scmp.ne.s32.totalorder %s129, %s143
      %p145 = scmp.eq.s32.totalorder %s30, 0
      %p146 = por %p144, %p145
      %s148 = sadd.s32 %s147, 1
      %p151 = scmp.eq.s32.totalorder %s24, 1
      %p152 = scmp.ne.s32.totalorder %s147, %s149
      %p153 = scmp.eq.s32.totalorder %s24, 0
      %p154 = por %p152, %p153
      %p155 = scmp.ne.s32.totalorder %s147, %s149
      %p156 = scmp.eq.s32.totalorder %s29, 1
      %p157 = por %p155, %p156
      %p158 = scmp.ne.s32.totalorder %s149, %s150
      %p159 = scmp.eq.s32.totalorder %s29, 0
      %p160 = por %p158, %p159
      %p161 = scmp.ne.s32.totalorder %s149, %s150
      %p162 = scmp.eq.s32.totalorder %s30, 1
      %p163 = por %p161, %p162
      %p165 = scmp.ne.s32.totalorder %s150, %s164
      %p166 = scmp.eq.s32.totalorder %s30, 0
      %p167 = por %p165, %p166
      %s169 = sadd.s32 %s168, 1
      %p172 = scmp.eq.s32.totalorder %s24, 1
      %p173 = scmp.ne.s32.totalorder %s168, %s170
      %p174 = scmp.eq.s32.totalorder %s24, 0
      %p175 = por %p173, %p174
      %p176 = scmp.ne.s32.totalorder %s168, %s170
      %p177 = scmp.eq.s32.totalorder %s29, 1
      %p178 = por %p176, %p177
      %p179 = scmp.ne.s32.totalorder %s170, %s171
      %p180 = scmp.eq.s32.totalorder %s29, 0
      %p181 = por %p179, %p180
      %p182 = scmp.ne.s32.totalorder %s170, %s171
      %p183 = scmp.eq.s32.totalorder %s30, 1
      %p184 = por %p182, %p183
      %p186 = scmp.ne.s32.totalorder %s171, %s185
      %p187 = scmp.eq.s32.totalorder %s30, 0
      %p188 = por %p186, %p187
      %s189 = ssub.s32 %s24, %s31
      %p190 = scmp.eq.s32.totalorder %s189, 0
      %s192 = sadd.s32 %s191, 1
      %s193 = scalar_select %p190, %s191, %s192
      %p196 = pneg %p190
      %p197 = scmp.eq.s32.totalorder %s24, 1
      %p198 = por %p196, %p197
      %p199 = scmp.ne.s32.totalorder %s191, %s194
      %p200 = scmp.eq.s32.totalorder %s24, 0
      %p201 = por %p199, %p200
      %p202 = scmp.ne.s32.totalorder %s191, %s194
      %p203 = scmp.eq.s32.totalorder %s29, 1
      %p204 = por %p202, %p203
      %p205 = scmp.ne.s32.totalorder %s194, %s195
      %p206 = scmp.eq.s32.totalorder %s29, 0
      %p207 = por %p205, %p206
      %p208 = scmp.ne.s32.totalorder %s194, %s195
      %p209 = scmp.eq.s32.totalorder %s30, 1
      %p210 = por %p208, %p209
      %p212 = scmp.ne.s32.totalorder %s195, %s211
      %p213 = scmp.eq.s32.totalorder %s30, 0
      %p214 = por %p212, %p213
      %p215 = scmp.le.s32.totalorder 1, %s24
      %p216 = scmp.lt.s32.totalorder %s24, 3
      %p217 = pnand %p215, %p216
      %p218 = pneg %p217
      // Predicated region
      $region9: #{tpu_custom_call.1} parent=5 // pred_check
        _
      $region10: #{tpu_custom_call.1} parent=5 // pred_check_branch
        %220 = sbr.rel (%p217) target = $region12
      $region11: #{tpu_custom_call.1} parent=5 // pred_region
        %s221 = ssub.s32 %s24, 1
        // Predicated region
        $region13: #{tpu_custom_call.1} parent=11 // pred_check
          %p222 = pneg %p97
        $region14: #{tpu_custom_call.1} parent=11 // pred_check_branch
          %224 = sbr.rel (%p222) target = $region16
        $region15: #{tpu_custom_call.1} parent=11 // pred_region
          %s226 = ssub.s32 512, 512
          %227 = vsyncadd [#allocation6], %s226
          %s228 = sshll.u32 [#allocation7], 4
          %s229 = int_to_ptr.vmem [resolvable:$true] %s228
          %234 = dma.hbm_to_vmem [thread:$0]  %s2, 512, %s229, [#allocation6], 128, 128, 8
        $region16: #{tpu_custom_call.1} parent=11 // pred_fallthru
          _
        // Predicated region
        $region17: #{tpu_custom_call.1} parent=11 // pred_check
          %p235 = pneg %p118
        $region18: #{tpu_custom_call.1} parent=11 // pred_check_branch
          %237 = sbr.rel (%p235) target = $region20
        $region19: #{tpu_custom_call.1} parent=11 // pred_region
          %s239 = ssub.s32 32, 32
          %240 = vsyncadd [#allocation9], %s239
          %s242 = sshll.u32 [#allocation8], 4
          %s243 = int_to_ptr.vmem [resolvable:$true] %s242
          %245 = dma.hbm_to_vmem [thread:$0]  %s3, 32, %s243, [#allocation9]
        $region20: #{tpu_custom_call.1} parent=11 // pred_fallthru
          _
        // Predicated region
        $region21: #{tpu_custom_call.1} parent=11 // pred_check
          %p246 = pneg %p139
        $region22: #{tpu_custom_call.1} parent=11 // pred_check_branch
          %248 = sbr.rel (%p246) target = $region24
        $region23: #{tpu_custom_call.1} parent=11 // pred_region
          %s250 = ssub.s32 12288, 12288
          %251 = vsyncadd [#allocation9], %s250
          %s252 = sshll.u32 [#allocation10], 4
          %s253 = int_to_ptr.vmem [resolvable:$true] %s252
          %258 = dma.hbm_to_vmem [thread:$0]  %s4, 12288, %s253, [#allocation9], 128, 128, 8
        $region24: #{tpu_custom_call.1} parent=11 // pred_fallthru
          _
        // Predicated region
        $region25: #{tpu_custom_call.1} parent=11 // pred_check
          %p259 = pneg %p160
        $region26: #{tpu_custom_call.1} parent=11 // pred_check_branch
          %261 = sbr.rel (%p259) target = $region28
        $region27: #{tpu_custom_call.1} parent=11 // pred_region
          %s263 = ssub.s32 32, 32
          %264 = vsyncadd [#allocation12], %s263
          %s266 = sshll.u32 [#allocation11], 4
          %s267 = int_to_ptr.vmem [resolvable:$true] %s266
          %269 = dma.hbm_to_vmem [thread:$0]  %s5, 32, %s267, [#allocation12]
        $region28: #{tpu_custom_call.1} parent=11 // pred_fallthru
          _
        // Predicated region
        $region29: #{tpu_custom_call.1} parent=11 // pred_check
          %p270 = pneg %p181
        $region30: #{tpu_custom_call.1} parent=11 // pred_check_branch
          %272 = sbr.rel (%p270) target = $region32
        $region31: #{tpu_custom_call.1} parent=11 // pred_region
          %s274 = ssub.s32 32, 32
          %275 = vsyncadd [#allocation12], %s274
          %s277 = sshll.u32 [#allocation13], 4
          %s278 = int_to_ptr.vmem [resolvable:$true] %s277
          %280 = dma.hbm_to_vmem [thread:$0]  %s6, 32, %s278, [#allocation12]
        $region32: #{tpu_custom_call.1} parent=11 // pred_fallthru
          _
      $region12: #{tpu_custom_call.1} parent=5 // pred_fallthru
        _
      %p281 = scmp.lt.s32.totalorder %s24, 2
      // Predicated region
      $region33: #{tpu_custom_call.1} parent=5 // pred_check
        %p282 = pneg %p281
      $region34: #{tpu_custom_call.1} parent=5 // pred_check_branch
        %284 = sbr.rel (%p282) target = $region36
      $region35: #{tpu_custom_call.1} parent=5 // pred_region
        // Predicated region
        $region37: #{tpu_custom_call.1} parent=35 // pred_check
          %p285 = pneg %p44
        $region38: #{tpu_custom_call.1} parent=35 // pred_check_branch
          %287 = sbr.rel (%p285) target = $region40
        $region39: #{tpu_custom_call.1} parent=35 // pred_region
          %s288 = sand.u32 %s34, 1
          %s289 = scalar_lea.sflag [#allocation3], %s288
          %s290 = sand.u32 %s34, 1
          %s291 = smul.addr %s290, 24
          %s292 = scalar_lea.vmem [#allocation2], %s291
          %s293 = smul.u32 3, %s24
          %s295 = ssub.s32 384, 384
          %296 = vsyncadd %s289, %s295
          %s297 = smul.addr %s293, 2
          %s298 = smul.addr %s297, 64
          %s299 = scalar_lea.hbm %s0, %s298
          %s300 = sshll.u32 %s292, 4
          %s301 = int_to_ptr.vmem [resolvable:$true] %s300
          %306 = dma.hbm_to_vmem [thread:$0]  %s299, 384, %s301, %s289, 64, 64, 4
        $region40: #{tpu_custom_call.1} parent=35 // pred_fallthru
          _
        // Predicated region
        $region41: #{tpu_custom_call.1} parent=35 // pred_check
          %p307 = pneg %p70
        $region42: #{tpu_custom_call.1} parent=35 // pred_check_branch
          %309 = sbr.rel (%p307) target = $region44
        $region43: #{tpu_custom_call.1} parent=35 // pred_region
          %s310 = sand.u32 %s24, 1
          %s311 = scalar_lea.sflag [#allocation6], %s310
          %s312 = sand.u32 %s60, 1
          %s313 = smul.addr %s312, 24
          %s314 = scalar_lea.vmem [#allocation5], %s313
          %s315 = smul.u32 3, %s24
          %s317 = ssub.s32 384, 384
          %318 = vsyncadd %s311, %s317
          %s319 = smul.addr %s315, 2
          %s320 = smul.addr %s319, 64
          %s321 = scalar_lea.hbm %s1, %s320
          %s322 = sshll.u32 %s314, 4
          %s323 = int_to_ptr.vmem [resolvable:$true] %s322
          %328 = dma.hbm_to_vmem [thread:$0]  %s321, 384, %s323, %s311, 64, 64, 4
        $region44: #{tpu_custom_call.1} parent=35 // pred_fallthru
          _
      $region36: #{tpu_custom_call.1} parent=5 // pred_fallthru
        _
      %p329 = scmp.le.s32.totalorder 1, %s24
      %p330 = scmp.lt.s32.totalorder %s24, 3
      %p331 = pnand %p329, %p330
      %p332 = pneg %p331
      // Predicated region
      $region45: #{tpu_custom_call.1} parent=5 // pred_check
        _
      $region46: #{tpu_custom_call.1} parent=5 // pred_check_branch
        %334 = sbr.rel (%p331) target = $region48
      $region47: #{tpu_custom_call.1} parent=5 // pred_region
        %s335 = ssub.s32 %s24, 1
        %s336 = sand.u32 %s37, 1
        %s337 = scalar_lea.sflag [#allocation3], %s336
        %s338 = sand.u32 %s37, 1
        %s339 = smul.addr %s338, 24
        %s340 = scalar_lea.vmem [#allocation2], %s339
        // Predicated region
        $region49: #{tpu_custom_call.1} parent=47 // pred_check
          %p341 = pneg %p50
        $region50: #{tpu_custom_call.1} parent=47 // pred_check_branch
          %343 = sbr.rel (%p341) target = $region52
        $region51: #{tpu_custom_call.1} parent=47 // pred_region
          %344 = dma.done %s337, 384
        $region52: #{tpu_custom_call.1} parent=47 // pred_fallthru
          _
        %s345 = sand.u32 %s29, 1
        %s346 = scalar_lea.sflag [#allocation6], %s345
        %s347 = sand.u32 %s63, 1
        %s348 = smul.addr %s347, 24
        %s349 = scalar_lea.vmem [#allocation5], %s348
        // Predicated region
        $region53: #{tpu_custom_call.1} parent=47 // pred_check
          %p350 = pneg %p76
        $region54: #{tpu_custom_call.1} parent=47 // pred_check_branch
          %352 = sbr.rel (%p350) target = $region56
        $region55: #{tpu_custom_call.1} parent=47 // pred_region
          %353 = dma.done %s346, 384
        $region56: #{tpu_custom_call.1} parent=47 // pred_fallthru
          _
        // Predicated region
        $region57: #{tpu_custom_call.1} parent=47 // pred_check
          %p354 = pneg %p97
        $region58: #{tpu_custom_call.1} parent=47 // pred_check_branch
          %356 = sbr.rel (%p354) target = $region60
        $region59: #{tpu_custom_call.1} parent=47 // pred_region
          %357 = dma.done [#allocation6], 512
        $region60: #{tpu_custom_call.1} parent=47 // pred_fallthru
          _
        // Predicated region
        $region61: #{tpu_custom_call.1} parent=47 // pred_check
          %p358 = pneg %p118
        $region62: #{tpu_custom_call.1} parent=47 // pred_check_branch
          %360 = sbr.rel (%p358) target = $region64
        $region63: #{tpu_custom_call.1} parent=47 // pred_region
          %361 = dma.done [#allocation9], 32
        $region64: #{tpu_custom_call.1} parent=47 // pred_fallthru
          _
        // Predicated region
        $region65: #{tpu_custom_call.1} parent=47 // pred_check
          %p362 = pneg %p139
        $region66: #{tpu_custom_call.1} parent=47 // pred_check_branch
          %364 = sbr.rel (%p362) target = $region68
        $region67: #{tpu_custom_call.1} parent=47 // pred_region
          %365 = dma.done [#allocation9], 12288
        $region68: #{tpu_custom_call.1} parent=47 // pred_fallthru
          _
        // Predicated region
        $region69: #{tpu_custom_call.1} parent=47 // pred_check
          %p366 = pneg %p160
        $region70: #{tpu_custom_call.1} parent=47 // pred_check_branch
          %368 = sbr.rel (%p366) target = $region72
        $region71: #{tpu_custom_call.1} parent=47 // pred_region
          %369 = dma.done [#allocation12], 32
        $region72: #{tpu_custom_call.1} parent=47 // pred_fallthru
          _
        // Predicated region
        $region73: #{tpu_custom_call.1} parent=47 // pred_check
          %p370 = pneg %p181
        $region74: #{tpu_custom_call.1} parent=47 // pred_check_branch
          %372 = sbr.rel (%p370) target = $region76
        $region75: #{tpu_custom_call.1} parent=47 // pred_region
          %373 = dma.done [#allocation12], 32
        $region76: #{tpu_custom_call.1} parent=47 // pred_fallthru
          _
        %s374 = sand.u32 %s37, 1
        %s375 = scalar_lea.sflag [#allocation3], %s374
        %s376 = sand.u32 %s37, 1
        %s377 = smul.addr %s376, 24
        %s378 = scalar_lea.vmem [#allocation2], %s377
        %p379 = pneg %p50
        %p380 = pneg %p47
        %s381 = sand.u32 %s29, 1
        %s382 = scalar_lea.sflag [#allocation6], %s381
        %s383 = sand.u32 %s63, 1
        %s384 = smul.addr %s383, 24
        %s385 = scalar_lea.vmem [#allocation5], %s384
        %p386 = pneg %p76
        %p387 = pneg %p73
        %p388 = pneg %p97
        %p389 = pneg %p94
        %p390 = pneg %p118
        %p391 = pneg %p115
        %p392 = pneg %p139
        %p393 = pneg %p136
        %p394 = pneg %p160
        %p395 = pneg %p157
        %p396 = pneg %p181
        %p397 = pneg %p178
        %p398 = pneg %p207
        %p399 = pneg %p204
        %s400 = sand.u32 %s194, 1
        %s401 = scalar_lea.sflag [#allocation4], %s400
        %s402 = sand.u32 %s194, 1
        %s403 = smul.addr %s402, 8
        %s404 = scalar_lea.vmem [#allocation14], %s403
        %s405 = smul.u32 3, %s29
        %s406 = smul.u32 3, %s29
        %v408 = vld [vmem:[%s340] sm:$0xf]
        %v409 = vld [vmem:[%s340 + $0x4] sm:$0xf]
        %v410 = vld [vmem:[%s340 + $0x8] sm:$0xf]
        %v411 = vld [vmem:[%s340 + $0xc] sm:$0xf]
        %v412 = vld [vmem:[%s340 + $0x10] sm:$0xf]
        %v413 = vld [vmem:[%s340 + $0x14] sm:$0xf]
        %v414 = vld [vmem:[%s349] sm:$0xf]
        %v415 = vld [vmem:[%s349 + $0x4] sm:$0xf]
        %v416 = vld [vmem:[%s349 + $0x8] sm:$0xf]
        %v417 = vld [vmem:[%s349 + $0xc] sm:$0xf]
        %v418 = vld [vmem:[%s349 + $0x10] sm:$0xf]
        %v419 = vld [vmem:[%s349 + $0x14] sm:$0xf]
        %v420 = vunpack.c.l.bf16 %v414
        %v421 = vunpack.c.l.bf16 %v415
        %v422 = vunpack.c.l.bf16 %v416
        %v423 = vunpack.c.l.bf16 %v417
        %v424 = vunpack.c.l.bf16 %v418
        %v425 = vunpack.c.l.bf16 %v419
        %v426 = vld [vmem:[#allocation7] sm:$0xff]
        %v427 = vld [vmem:[#allocation7 + $0x8] sm:$0xff]
        %v428 = vld [vmem:[#allocation7 + $0x10] sm:$0xff]
        %v429 = vld [vmem:[#allocation7 + $0x18] sm:$0xff]
        %v436 = vunpack.c.l.b16 %v408
        %v437 = vunpack.c.l.b16 %v409
        %v438 = vunpack.c.l.b16 %v410
        %v439 = vunpack.c.l.b16 %v411
        %v440 = vunpack.c.l.b16 %v412
        %v441 = vunpack.c.l.b16 %v413
        %v442 = vpack.c.b16 %v437, %v436
        %v443 = vpack.c.b16 %v439, %v438
        %v444 = vpack.c.b16 %v441, %v440
        %v449 = vunpack.c.l.b16 %v426
        %v450 = vunpack.c.h.b16 %v426
        %v451 = vunpack.c.l.b16 %v427
        %v452 = vunpack.c.h.b16 %v427
        %v453 = vunpack.c.l.b16 %v428
        %v454 = vunpack.c.h.b16 %v428
        %v455 = vunpack.c.l.b16 %v429
        %v456 = vunpack.c.h.b16 %v429
        %v457 = vpack.c.b16 %v451, %v449
        %v458 = vpack.c.b16 %v452, %v450
        %v459 = vpack.c.b16 %v455, %v453
        %v460 = vpack.c.b16 %v456, %v454
        %vm465 = vcmask 261120
        %v467 = vsel %vm465, %v442, 0
        %v470 = vsel %vm465, %v443, 0
        %v473 = vsel %vm465, %v444, 0
        %475 = vmatprep.subr.bf16.mxu0 %v458
        %476 = vmatpush1.bf16.msra.mxu0 %v457
        %477 = vmatprep.subr.bf16.mxu0 %v460
        %478 = vmatpush1.bf16.msra.mxu0 %v459
        %479 = vmatprep.subr.bf16.mxu0 0
        %480 = vmatpush1.bf16.msra.mxu0 0
        %481 = vmatprep.subr.bf16.mxu0 0
        %482 = vmatpush1.bf16.msra.mxu0 0
        %483 = vmatprep.subr.bf16.mxu0 0
        %484 = vmatpush1.bf16.msra.mxu0 0
        %485 = vmatprep.subr.bf16.mxu0 0
        %486 = vmatpush1.bf16.msra.mxu0 0
        %487 = vmatprep.subr.bf16.mxu0 0
        %488 = vmatpush1.bf16.msra.mxu0 0
        %489 = vmatprep.subr.bf16.mxu0 0
        %490 = vmatpush1.bf16.msra.mxu0 0
        %491 = vmatprep.subr.bf16.mxu0 0
        %492 = vmatpush1.bf16.msra.mxu0 0
        %493 = vmatprep.subr.bf16.mxu0 0
        %494 = vmatpush1.bf16.msra.mxu0 0
        %495 = vmatprep.subr.bf16.mxu0 0
        %496 = vmatpush1.bf16.msra.mxu0 0
        %497 = vmatprep.subr.bf16.mxu0 0
        %498 = vmatpush1.bf16.msra.mxu0 0
        %499 = vmatprep.subr.bf16.mxu0 0
        %500 = vmatpush1.bf16.msra.mxu0 0
        %501 = vmatprep.subr.bf16.mxu0 0
        %502 = vmatpush1.bf16.msra.mxu0 0
        %503 = vmatprep.subr.bf16.mxu0 0
        %504 = vmatpush1.bf16.msra.mxu0 0
        %505 = vmatprep.subr.bf16.mxu0 0
        %506 = vmatpush1.bf16.msra.mxu0 0
        %507 = vmatprep.mubr.bf16.mxu0 0
        %508 = vmatmul.mubr.bf16.gmra.mrb[0].mxu0 %v467
        %v509 = vpop.f32.mrb[0].mxu0
        %v510 = vadd.f32 0.0, %v509
        %v511 = vpop.f32.mrb[0].mxu0
        %v512 = vadd.f32 0.0, %v511
        %v513 = vpop.f32.mrb[0].mxu0
        %v514 = vadd.f32 0.0, %v513
        %v515 = vpop.f32.mrb[0].mxu0
        %v516 = vadd.f32 0.0, %v515
        %517 = vmatprep.mubr.bf16.mxu0 0
        %518 = vmatmul.mubr.bf16.gmra.mrb[0].mxu0 %v470
        %v519 = vpop.f32.mrb[0].mxu0
        %v520 = vadd.f32 0.0, %v519
        %v521 = vpop.f32.mrb[0].mxu0
        %v522 = vadd.f32 0.0, %v521
        %v523 = vpop.f32.mrb[0].mxu0
        %v524 = vadd.f32 0.0, %v523
        %v525 = vpop.f32.mrb[0].mxu0
        %v526 = vadd.f32 0.0, %v525
        %527 = vmatprep.mubr.bf16.mxu0 0
        %528 = vmatmul.mubr.bf16.gmra.mrb[0].mxu0 %v473
        %v529 = vpop.f32.mrb[0].mxu0
        %v530 = vadd.f32 0.0, %v529
        %v531 = vpop.f32.mrb[0].mxu0
        %v532 = vadd.f32 0.0, %v531
        %v533 = vpop.f32.mrb[0].mxu0
        %v534 = vadd.f32 0.0, %v533
        %v535 = vpop.f32.mrb[0].mxu0
        %v536 = vadd.f32 0.0, %v535
        %537 = vdwg.mxu0
        %539 = vset.pattern.permute.xlu0 0
        %540 = vperm.xlu0 %539, %v420
        %v541 = vpop.permute.xlu0 %540
        %544 = vset.pattern.permute.xlu0 0
        %545 = vperm.xlu0 %544, %v421
        %v546 = vpop.permute.xlu0 %545
        %549 = vset.pattern.permute.xlu0 0
        %550 = vperm.xlu0 %549, %v422
        %v551 = vpop.permute.xlu0 %550
        %554 = vset.pattern.permute.xlu0 0
        %555 = vperm.xlu0 %554, %v423
        %v556 = vpop.permute.xlu0 %555
        %559 = vset.pattern.permute.xlu0 0
        %560 = vperm.xlu0 %559, %v424
        %v561 = vpop.permute.xlu0 %560
        %564 = vset.pattern.permute.xlu0 0
        %565 = vperm.xlu0 %564, %v425
        %v566 = vpop.permute.xlu0 %565
        %v568 = vmul.f32 %v510, %v541
        %v569 = vmul.f32 %v512, %v541
        %v570 = vmul.f32 %v514, %v546
        %v571 = vmul.f32 %v516, %v546
        %v572 = vmul.f32 %v520, %v551
        %v573 = vmul.f32 %v522, %v551
        %v574 = vmul.f32 %v524, %v556
        %v575 = vmul.f32 %v526, %v556
        %v576 = vmul.f32 %v530, %v561
        %v577 = vmul.f32 %v532, %v561
        %v578 = vmul.f32 %v534, %v566
        %v579 = vmul.f32 %v536, %v566
        %v580 = vld [vmem:[#allocation8] sm:$0x3]
        %v582 = vlaneseq
        %v583 = vshrl.u32 %v582, 7
        %v584 = vsub.s32 0, %v583
        %v585 = vrot.slane %v580, %v584
        %v586 = vlaneseq
        %v587 = vshrl.u32 %v586, 7
        %v588 = vsub.s32 1, %v587
        %v589 = vrot.slane %v580, %v588
        %v592 = vadd.f32 %v568, %v585
        %v593 = vadd.f32 %v569, %v589
        %v594 = vadd.f32 %v570, %v585
        %v595 = vadd.f32 %v571, %v589
        %v596 = vadd.f32 %v572, %v585
        %v597 = vadd.f32 %v573, %v589
        %v598 = vadd.f32 %v574, %v585
        %v599 = vadd.f32 %v575, %v589
        %v600 = vadd.f32 %v576, %v585
        %v601 = vadd.f32 %v577, %v589
        %v602 = vadd.f32 %v578, %v585
        %v603 = vadd.f32 %v579, %v589
        %v604 = vrot.slane %v592, 1
        %v605 = vrot.slane %v593, 1
        %v606 = vrot.slane %v594, 1
        %v607 = vrot.slane %v595, 1
        %v608 = vrot.slane %v596, 1
        %v609 = vrot.slane %v597, 1
        %v610 = vrot.slane %v598, 1
        %v611 = vrot.slane %v599, 1
        %v612 = vrot.slane %v600, 1
        %v613 = vrot.slane %v601, 1
        %v614 = vrot.slane %v602, 1
        %v615 = vrot.slane %v603, 1
        %v616 = vlaneseq
        %v617 = vshrl.u32 %v616, 7
        %vm618 = vcmp.lt.s32.totalorder %v617, 7
        %v619 = vsel %vm618, %v612, %v614
        %v620 = vsel %vm618, %v613, %v615
        %v621 = vsel %vm618, %v610, %v612
        %v622 = vsel %vm618, %v611, %v613
        %v623 = vsel %vm618, %v608, %v610
        %v624 = vsel %vm618, %v609, %v611
        %v625 = vsel %vm618, %v606, %v608
        %v626 = vsel %vm618, %v607, %v609
        %v627 = vsel %vm618, %v604, %v606
        %v628 = vsel %vm618, %v605, %v607
        %v629 = vsel %vm618, %v614, %v604
        %v630 = vsel %vm618, %v615, %v605
        %v631 = vrot.slane %v592, 2
        %v632 = vrot.slane %v593, 2
        %v633 = vrot.slane %v594, 2
        %v634 = vrot.slane %v595, 2
        %v635 = vrot.slane %v596, 2
        %v636 = vrot.slane %v597, 2
        %v637 = vrot.slane %v598, 2
        %v638 = vrot.slane %v599, 2
        %v639 = vrot.slane %v600, 2
        %v640 = vrot.slane %v601, 2
        %v641 = vrot.slane %v602, 2
        %v642 = vrot.slane %v603, 2
        %vm643 = vcmp.lt.s32.totalorder %v617, 6
        %v644 = vsel %vm643, %v639, %v641
        %v645 = vsel %vm643, %v640, %v642
        %v646 = vsel %vm643, %v637, %v639
        %v647 = vsel %vm643, %v638, %v640
        %v648 = vsel %vm643, %v635, %v637
        %v649 = vsel %vm643, %v636, %v638
        %v650 = vsel %vm643, %v633, %v635
        %v651 = vsel %vm643, %v634, %v636
        %v652 = vsel %vm643, %v631, %v633
        %v653 = vsel %vm643, %v632, %v634
        %v654 = vsel %vm643, %v641, %v631
        %v655 = vsel %vm643, %v642, %v632
        %v656 = vpack.c.bf16 %v594, %v592
        %v657 = vpack.c.bf16 %v595, %v593
        %v658 = vpack.c.bf16 %v625, %v627
        %v659 = vpack.c.bf16 %v626, %v628
        %v660 = vpack.c.bf16 %v650, %v652
        %v661 = vpack.c.bf16 %v651, %v653
        %v662 = vpack.c.bf16 %v598, %v596
        %v663 = vpack.c.bf16 %v599, %v597
        %v664 = vpack.c.bf16 %v621, %v623
        %v665 = vpack.c.bf16 %v622, %v624
        %v666 = vpack.c.bf16 %v646, %v648
        %v667 = vpack.c.bf16 %v647, %v649
        %v668 = vpack.c.bf16 %v602, %v600
        %v669 = vpack.c.bf16 %v603, %v601
        %v670 = vpack.c.bf16 %v629, %v619
        %v671 = vpack.c.bf16 %v630, %v620
        %v672 = vpack.c.bf16 %v654, %v644
        %v673 = vpack.c.bf16 %v655, %v645
        %v674 = vld [vmem:[#allocation10] sm:$0xff]
        %v675 = vld [vmem:[#allocation10 + $0x8] sm:$0xff]
        %v676 = vld [vmem:[#allocation10 + $0x10] sm:$0xff]
        %v677 = vld [vmem:[#allocation10 + $0x18] sm:$0xff]
        %v678 = vld [vmem:[#allocation10 + $0x20] sm:$0xff]
        %v679 = vld [vmem:[#allocation10 + $0x28] sm:$0xff]
        %v680 = vld [vmem:[#allocation10 + $0x30] sm:$0xff]
        %v681 = vld [vmem:[#allocation10 + $0x38] sm:$0xff]
        %v682 = vld [vmem:[#allocation10 + $0x40] sm:$0xff]
        %v683 = vld [vmem:[#allocation10 + $0x48] sm:$0xff]
        %v684 = vld [vmem:[#allocation10 + $0x50] sm:$0xff]
        %v685 = vld [vmem:[#allocation10 + $0x58] sm:$0xff]
        %v686 = vld [vmem:[#allocation10 + $0x60] sm:$0xff]
        %v687 = vld [vmem:[#allocation10 + $0x68] sm:$0xff]
        %v688 = vld [vmem:[#allocation10 + $0x70] sm:$0xff]
        %v689 = vld [vmem:[#allocation10 + $0x78] sm:$0xff]
        %v690 = vld [vmem:[#allocation10 + $0x80] sm:$0xff]
        %v691 = vld [vmem:[#allocation10 + $0x88] sm:$0xff]
        %v692 = vld [vmem:[#allocation10 + $0x90] sm:$0xff]
        %v693 = vld [vmem:[#allocation10 + $0x98] sm:$0xff]
        %v694 = vld [vmem:[#allocation10 + $0xa0] sm:$0xff]
        %v695 = vld [vmem:[#allocation10 + $0xa8] sm:$0xff]
        %v696 = vld [vmem:[#allocation10 + $0xb0] sm:$0xff]
        %v697 = vld [vmem:[#allocation10 + $0xb8] sm:$0xff]
        %v698 = vld [vmem:[#allocation10 + $0xc0] sm:$0xff]
        %v699 = vld [vmem:[#allocation10 + $0xc8] sm:$0xff]
        %v700 = vld [vmem:[#allocation10 + $0xd0] sm:$0xff]
        %v701 = vld [vmem:[#allocation10 + $0xd8] sm:$0xff]
        %v702 = vld [vmem:[#allocation10 + $0xe0] sm:$0xff]
        %v703 = vld [vmem:[#allocation10 + $0xe8] sm:$0xff]
        %v704 = vld [vmem:[#allocation10 + $0xf0] sm:$0xff]
        %v705 = vld [vmem:[#allocation10 + $0xf8] sm:$0xff]
        %v706 = vld [vmem:[#allocation10 + $0x100] sm:$0xff]
        %v707 = vld [vmem:[#allocation10 + $0x108] sm:$0xff]
        %v708 = vld [vmem:[#allocation10 + $0x110] sm:$0xff]
        %v709 = vld [vmem:[#allocation10 + $0x118] sm:$0xff]
        %v710 = vld [vmem:[#allocation10 + $0x120] sm:$0xff]
        %v711 = vld [vmem:[#allocation10 + $0x128] sm:$0xff]
        %v712 = vld [vmem:[#allocation10 + $0x130] sm:$0xff]
        %v713 = vld [vmem:[#allocation10 + $0x138] sm:$0xff]
        %v714 = vld [vmem:[#allocation10 + $0x140] sm:$0xff]
        %v715 = vld [vmem:[#allocation10 + $0x148] sm:$0xff]
        %v716 = vld [vmem:[#allocation10 + $0x150] sm:$0xff]
        %v717 = vld [vmem:[#allocation10 + $0x158] sm:$0xff]
        %v718 = vld [vmem:[#allocation10 + $0x160] sm:$0xff]
        %v719 = vld [vmem:[#allocation10 + $0x168] sm:$0xff]
        %v720 = vld [vmem:[#allocation10 + $0x170] sm:$0xff]
        %v721 = vld [vmem:[#allocation10 + $0x178] sm:$0xff]
        %v722 = vld [vmem:[#allocation10 + $0x180] sm:$0xff]
        %v723 = vld [vmem:[#allocation10 + $0x188] sm:$0xff]
        %v724 = vld [vmem:[#allocation10 + $0x190] sm:$0xff]
        %v725 = vld [vmem:[#allocation10 + $0x198] sm:$0xff]
        %v726 = vld [vmem:[#allocation10 + $0x1a0] sm:$0xff]
        %v727 = vld [vmem:[#allocation10 + $0x1a8] sm:$0xff]
        %v728 = vld [vmem:[#allocation10 + $0x1b0] sm:$0xff]
        %v729 = vld [vmem:[#allocation10 + $0x1b8] sm:$0xff]
        %v730 = vld [vmem:[#allocation10 + $0x1c0] sm:$0xff]
        %v731 = vld [vmem:[#allocation10 + $0x1c8] sm:$0xff]
        %v732 = vld [vmem:[#allocation10 + $0x1d0] sm:$0xff]
        %v733 = vld [vmem:[#allocation10 + $0x1d8] sm:$0xff]
        %v734 = vld [vmem:[#allocation10 + $0x1e0] sm:$0xff]
        %v735 = vld [vmem:[#allocation10 + $0x1e8] sm:$0xff]
        %v736 = vld [vmem:[#allocation10 + $0x1f0] sm:$0xff]
        %v737 = vld [vmem:[#allocation10 + $0x1f8] sm:$0xff]
        %v738 = vld [vmem:[#allocation10 + $0x200] sm:$0xff]
        %v739 = vld [vmem:[#allocation10 + $0x208] sm:$0xff]
        %v740 = vld [vmem:[#allocation10 + $0x210] sm:$0xff]
        %v741 = vld [vmem:[#allocation10 + $0x218] sm:$0xff]
        %v742 = vld [vmem:[#allocation10 + $0x220] sm:$0xff]
        %v743 = vld [vmem:[#allocation10 + $0x228] sm:$0xff]
        %v744 = vld [vmem:[#allocation10 + $0x230] sm:$0xff]
        %v745 = vld [vmem:[#allocation10 + $0x238] sm:$0xff]
        %v746 = vld [vmem:[#allocation10 + $0x240] sm:$0xff]
        %v747 = vld [vmem:[#allocation10 + $0x248] sm:$0xff]
        %v748 = vld [vmem:[#allocation10 + $0x250] sm:$0xff]
        %v749 = vld [vmem:[#allocation10 + $0x258] sm:$0xff]
        %v750 = vld [vmem:[#allocation10 + $0x260] sm:$0xff]
        %v751 = vld [vmem:[#allocation10 + $0x268] sm:$0xff]
        %v752 = vld [vmem:[#allocation10 + $0x270] sm:$0xff]
        %v753 = vld [vmem:[#allocation10 + $0x278] sm:$0xff]
        %v754 = vld [vmem:[#allocation10 + $0x280] sm:$0xff]
        %v755 = vld [vmem:[#allocation10 + $0x288] sm:$0xff]
        %v756 = vld [vmem:[#allocation10 + $0x290] sm:$0xff]
        %v757 = vld [vmem:[#allocation10 + $0x298] sm:$0xff]
        %v758 = vld [vmem:[#allocation10 + $0x2a0] sm:$0xff]
        %v759 = vld [vmem:[#allocation10 + $0x2a8] sm:$0xff]
        %v760 = vld [vmem:[#allocation10 + $0x2b0] sm:$0xff]
        %v761 = vld [vmem:[#allocation10 + $0x2b8] sm:$0xff]
        %v762 = vld [vmem:[#allocation10 + $0x2c0] sm:$0xff]
        %v763 = vld [vmem:[#allocation10 + $0x2c8] sm:$0xff]
        %v764 = vld [vmem:[#allocation10 + $0x2d0] sm:$0xff]
        %v765 = vld [vmem:[#allocation10 + $0x2d8] sm:$0xff]
        %v766 = vld [vmem:[#allocation10 + $0x2e0] sm:$0xff]
        %v767 = vld [vmem:[#allocation10 + $0x2e8] sm:$0xff]
        %v768 = vld [vmem:[#allocation10 + $0x2f0] sm:$0xff]
        %v769 = vld [vmem:[#allocation10 + $0x2f8] sm:$0xff]
        %v770 = vld [vmem:[#allocation11] sm:$0x3]
        %v772 = vlaneseq
        %v773 = vshrl.u32 %v772, 7
        %v774 = vsub.s32 0, %v773
        %v775 = vrot.slane %v770, %v774
        %v776 = vlaneseq
        %v777 = vshrl.u32 %v776, 7
        %v778 = vsub.s32 1, %v777
        %v779 = vrot.slane %v770, %v778
        %v878 = vunpack.c.l.b16 %v674
        %v879 = vunpack.c.h.b16 %v674
        %v880 = vunpack.c.l.b16 %v675
        %v881 = vunpack.c.h.b16 %v675
        %v882 = vunpack.c.l.b16 %v676
        %v883 = vunpack.c.h.b16 %v676
        %v884 = vunpack.c.l.b16 %v677
        %v885 = vunpack.c.h.b16 %v677
        %v886 = vunpack.c.l.b16 %v678
        %v887 = vunpack.c.h.b16 %v678
        %v888 = vunpack.c.l.b16 %v679
        %v889 = vunpack.c.h.b16 %v679
        %v890 = vunpack.c.l.b16 %v680
        %v891 = vunpack.c.h.b16 %v680
        %v892 = vunpack.c.l.b16 %v681
        %v893 = vunpack.c.h.b16 %v681
        %v894 = vunpack.c.l.b16 %v682
        %v895 = vunpack.c.h.b16 %v682
        %v896 = vunpack.c.l.b16 %v683
        %v897 = vunpack.c.h.b16 %v683
        %v898 = vunpack.c.l.b16 %v684
        %v899 = vunpack.c.h.b16 %v684
        %v900 = vunpack.c.l.b16 %v685
        %v901 = vunpack.c.h.b16 %v685
        %v902 = vunpack.c.l.b16 %v686
        %v903 = vunpack.c.h.b16 %v686
        %v904 = vunpack.c.l.b16 %v687
        %v905 = vunpack.c.h.b16 %v687
        %v906 = vunpack.c.l.b16 %v688
        %v907 = vunpack.c.h.b16 %v688
        %v908 = vunpack.c.l.b16 %v689
        %v909 = vunpack.c.h.b16 %v689
        %v910 = vunpack.c.l.b16 %v690
        %v911 = vunpack.c.h.b16 %v690
        %v912 = vunpack.c.l.b16 %v691
        %v913 = vunpack.c.h.b16 %v691
        %v914 = vunpack.c.l.b16 %v692
        %v915 = vunpack.c.h.b16 %v692
        %v916 = vunpack.c.l.b16 %v693
        %v917 = vunpack.c.h.b16 %v693
        %v918 = vunpack.c.l.b16 %v694
        %v919 = vunpack.c.h.b16 %v694
        %v920 = vunpack.c.l.b16 %v695
        %v921 = vunpack.c.h.b16 %v695
        %v922 = vunpack.c.l.b16 %v696
        %v923 = vunpack.c.h.b16 %v696
        %v924 = vunpack.c.l.b16 %v697
        %v925 = vunpack.c.h.b16 %v697
        %v926 = vunpack.c.l.b16 %v698
        %v927 = vunpack.c.h.b16 %v698
        %v928 = vunpack.c.l.b16 %v699
        %v929 = vunpack.c.h.b16 %v699
        %v930 = vunpack.c.l.b16 %v700
        %v931 = vunpack.c.h.b16 %v700
        %v932 = vunpack.c.l.b16 %v701
        %v933 = vunpack.c.h.b16 %v701
        %v934 = vunpack.c.l.b16 %v702
        %v935 = vunpack.c.h.b16 %v702
        %v936 = vunpack.c.l.b16 %v703
        %v937 = vunpack.c.h.b16 %v703
        %v938 = vunpack.c.l.b16 %v704
        %v939 = vunpack.c.h.b16 %v704
        %v940 = vunpack.c.l.b16 %v705
        %v941 = vunpack.c.h.b16 %v705
        %v942 = vunpack.c.l.b16 %v706
        %v943 = vunpack.c.h.b16 %v706
        %v944 = vunpack.c.l.b16 %v707
        %v945 = vunpack.c.h.b16 %v707
        %v946 = vunpack.c.l.b16 %v708
        %v947 = vunpack.c.h.b16 %v708
        %v948 = vunpack.c.l.b16 %v709
        %v949 = vunpack.c.h.b16 %v709
        %v950 = vunpack.c.l.b16 %v710
        %v951 = vunpack.c.h.b16 %v710
        %v952 = vunpack.c.l.b16 %v711
        %v953 = vunpack.c.h.b16 %v711
        %v954 = vunpack.c.l.b16 %v712
        %v955 = vunpack.c.h.b16 %v712
        %v956 = vunpack.c.l.b16 %v713
        %v957 = vunpack.c.h.b16 %v713
        %v958 = vunpack.c.l.b16 %v714
        %v959 = vunpack.c.h.b16 %v714
        %v960 = vunpack.c.l.b16 %v715
        %v961 = vunpack.c.h.b16 %v715
        %v962 = vunpack.c.l.b16 %v716
        %v963 = vunpack.c.h.b16 %v716
        %v964 = vunpack.c.l.b16 %v717
        %v965 = vunpack.c.h.b16 %v717
        %v966 = vunpack.c.l.b16 %v718
        %v967 = vunpack.c.h.b16 %v718
        %v968 = vunpack.c.l.b16 %v719
        %v969 = vunpack.c.h.b16 %v719
        %v970 = vunpack.c.l.b16 %v720
        %v971 = vunpack.c.h.b16 %v720
        %v972 = vunpack.c.l.b16 %v721
        %v973 = vunpack.c.h.b16 %v721
        %v974 = vunpack.c.l.b16 %v722
        %v975 = vunpack.c.h.b16 %v722
        %v976 = vunpack.c.l.b16 %v723
        %v977 = vunpack.c.h.b16 %v723
        %v978 = vunpack.c.l.b16 %v724
        %v979 = vunpack.c.h.b16 %v724
        %v980 = vunpack.c.l.b16 %v725
        %v981 = vunpack.c.h.b16 %v725
        %v982 = vunpack.c.l.b16 %v726
        %v983 = vunpack.c.h.b16 %v726
        %v984 = vunpack.c.l.b16 %v727
        %v985 = vunpack.c.h.b16 %v727
        %v986 = vunpack.c.l.b16 %v728
        %v987 = vunpack.c.h.b16 %v728
        %v988 = vunpack.c.l.b16 %v729
        %v989 = vunpack.c.h.b16 %v729
        %v990 = vunpack.c.l.b16 %v730
        %v991 = vunpack.c.h.b16 %v730
        %v992 = vunpack.c.l.b16 %v731
        %v993 = vunpack.c.h.b16 %v731
        %v994 = vunpack.c.l.b16 %v732
        %v995 = vunpack.c.h.b16 %v732
        %v996 = vunpack.c.l.b16 %v733
        %v997 = vunpack.c.h.b16 %v733
        %v998 = vunpack.c.l.b16 %v734
        %v999 = vunpack.c.h.b16 %v734
        %v1000 = vunpack.c.l.b16 %v735
        %v1001 = vunpack.c.h.b16 %v735
        %v1002 = vunpack.c.l.b16 %v736
        %v1003 = vunpack.c.h.b16 %v736
        %v1004 = vunpack.c.l.b16 %v737
        %v1005 = vunpack.c.h.b16 %v737
        %v1006 = vunpack.c.l.b16 %v738
        %v1007 = vunpack.c.h.b16 %v738
        %v1008 = vunpack.c.l.b16 %v739
        %v1009 = vunpack.c.h.b16 %v739
        %v1010 = vunpack.c.l.b16 %v740
        %v1011 = vunpack.c.h.b16 %v740
        %v1012 = vunpack.c.l.b16 %v741
        %v1013 = vunpack.c.h.b16 %v741
        %v1014 = vunpack.c.l.b16 %v742
        %v1015 = vunpack.c.h.b16 %v742
        %v1016 = vunpack.c.l.b16 %v743
        %v1017 = vunpack.c.h.b16 %v743
        %v1018 = vunpack.c.l.b16 %v744
        %v1019 = vunpack.c.h.b16 %v744
        %v1020 = vunpack.c.l.b16 %v745
        %v1021 = vunpack.c.h.b16 %v745
        %v1022 = vunpack.c.l.b16 %v746
        %v1023 = vunpack.c.h.b16 %v746
        %v1024 = vunpack.c.l.b16 %v747
        %v1025 = vunpack.c.h.b16 %v747
        %v1026 = vunpack.c.l.b16 %v748
        %v1027 = vunpack.c.h.b16 %v748
        %v1028 = vunpack.c.l.b16 %v749
        %v1029 = vunpack.c.h.b16 %v749
        %v1030 = vunpack.c.l.b16 %v750
        %v1031 = vunpack.c.h.b16 %v750
        %v1032 = vunpack.c.l.b16 %v751
        %v1033 = vunpack.c.h.b16 %v751
        %v1034 = vunpack.c.l.b16 %v752
        %v1035 = vunpack.c.h.b16 %v752
        %v1036 = vunpack.c.l.b16 %v753
        %v1037 = vunpack.c.h.b16 %v753
        %v1038 = vunpack.c.l.b16 %v754
        %v1039 = vunpack.c.h.b16 %v754
        %v1040 = vunpack.c.l.b16 %v755
        %v1041 = vunpack.c.h.b16 %v755
        %v1042 = vunpack.c.l.b16 %v756
        %v1043 = vunpack.c.h.b16 %v756
        %v1044 = vunpack.c.l.b16 %v757
        %v1045 = vunpack.c.h.b16 %v757
        %v1046 = vunpack.c.l.b16 %v758
        %v1047 = vunpack.c.h.b16 %v758
        %v1048 = vunpack.c.l.b16 %v759
        %v1049 = vunpack.c.h.b16 %v759
        %v1050 = vunpack.c.l.b16 %v760
        %v1051 = vunpack.c.h.b16 %v760
        %v1052 = vunpack.c.l.b16 %v761
        %v1053 = vunpack.c.h.b16 %v761
        %v1054 = vunpack.c.l.b16 %v762
        %v1055 = vunpack.c.h.b16 %v762
        %v1056 = vunpack.c.l.b16 %v763
        %v1057 = vunpack.c.h.b16 %v763
        %v1058 = vunpack.c.l.b16 %v764
        %v1059 = vunpack.c.h.b16 %v764
        %v1060 = vunpack.c.l.b16 %v765
        %v1061 = vunpack.c.h.b16 %v765
        %v1062 = vunpack.c.l.b16 %v766
        %v1063 = vunpack.c.h.b16 %v766
        %v1064 = vunpack.c.l.b16 %v767
        %v1065 = vunpack.c.h.b16 %v767
        %v1066 = vunpack.c.l.b16 %v768
        %v1067 = vunpack.c.h.b16 %v768
        %v1068 = vunpack.c.l.b16 %v769
        %v1069 = vunpack.c.h.b16 %v769
        %v1070 = vpack.c.b16 %v880, %v878
        %v1071 = vpack.c.b16 %v881, %v879
        %v1072 = vpack.c.b16 %v884, %v882
        %v1073 = vpack.c.b16 %v885, %v883
        %v1074 = vpack.c.b16 %v888, %v886
        %v1075 = vpack.c.b16 %v889, %v887
        %v1076 = vpack.c.b16 %v892, %v890
        %v1077 = vpack.c.b16 %v893, %v891
        %v1078 = vpack.c.b16 %v896, %v894
        %v1079 = vpack.c.b16 %v897, %v895
        %v1080 = vpack.c.b16 %v900, %v898
        %v1081 = vpack.c.b16 %v901, %v899
        %v1082 = vpack.c.b16 %v904, %v902
        %v1083 = vpack.c.b16 %v905, %v903
        %v1084 = vpack.c.b16 %v908, %v906
        %v1085 = vpack.c.b16 %v909, %v907
        %v1086 = vpack.c.b16 %v912, %v910
        %v1087 = vpack.c.b16 %v913, %v911
        %v1088 = vpack.c.b16 %v916, %v914
        %v1089 = vpack.c.b16 %v917, %v915
        %v1090 = vpack.c.b16 %v920, %v918
        %v1091 = vpack.c.b16 %v921, %v919
        %v1092 = vpack.c.b16 %v924, %v922
        %v1093 = vpack.c.b16 %v925, %v923
        %v1094 = vpack.c.b16 %v928, %v926
        %v1095 = vpack.c.b16 %v929, %v927
        %v1096 = vpack.c.b16 %v932, %v930
        %v1097 = vpack.c.b16 %v933, %v931
        %v1098 = vpack.c.b16 %v936, %v934
        %v1099 = vpack.c.b16 %v937, %v935
        %v1100 = vpack.c.b16 %v940, %v938
        %v1101 = vpack.c.b16 %v941, %v939
        %v1102 = vpack.c.b16 %v944, %v942
        %v1103 = vpack.c.b16 %v945, %v943
        %v1104 = vpack.c.b16 %v948, %v946
        %v1105 = vpack.c.b16 %v949, %v947
        %v1106 = vpack.c.b16 %v952, %v950
        %v1107 = vpack.c.b16 %v953, %v951
        %v1108 = vpack.c.b16 %v956, %v954
        %v1109 = vpack.c.b16 %v957, %v955
        %v1110 = vpack.c.b16 %v960, %v958
        %v1111 = vpack.c.b16 %v961, %v959
        %v1112 = vpack.c.b16 %v964, %v962
        %v1113 = vpack.c.b16 %v965, %v963
        %v1114 = vpack.c.b16 %v968, %v966
        %v1115 = vpack.c.b16 %v969, %v967
        %v1116 = vpack.c.b16 %v972, %v970
        %v1117 = vpack.c.b16 %v973, %v971
        %v1118 = vpack.c.b16 %v976, %v974
        %v1119 = vpack.c.b16 %v977, %v975
        %v1120 = vpack.c.b16 %v980, %v978
        %v1121 = vpack.c.b16 %v981, %v979
        %v1122 = vpack.c.b16 %v984, %v982
        %v1123 = vpack.c.b16 %v985, %v983
        %v1124 = vpack.c.b16 %v988, %v986
        %v1125 = vpack.c.b16 %v989, %v987
        %v1126 = vpack.c.b16 %v992, %v990
        %v1127 = vpack.c.b16 %v993, %v991
        %v1128 = vpack.c.b16 %v996, %v994
        %v1129 = vpack.c.b16 %v997, %v995
        %v1130 = vpack.c.b16 %v1000, %v998
        %v1131 = vpack.c.b16 %v1001, %v999
        %v1132 = vpack.c.b16 %v1004, %v1002
        %v1133 = vpack.c.b16 %v1005, %v1003
        %v1134 = vpack.c.b16 %v1008, %v1006
        %v1135 = vpack.c.b16 %v1009, %v1007
        %v1136 = vpack.c.b16 %v1012, %v1010
        %v1137 = vpack.c.b16 %v1013, %v1011
        %v1138 = vpack.c.b16 %v1016, %v1014
        %v1139 = vpack.c.b16 %v1017, %v1015
        %v1140 = vpack.c.b16 %v1020, %v1018
        %v1141 = vpack.c.b16 %v1021, %v1019
        %v1142 = vpack.c.b16 %v1024, %v1022
        %v1143 = vpack.c.b16 %v1025, %v1023
        %v1144 = vpack.c.b16 %v1028, %v1026
        %v1145 = vpack.c.b16 %v1029, %v1027
        %v1146 = vpack.c.b16 %v1032, %v1030
        %v1147 = vpack.c.b16 %v1033, %v1031
        %v1148 = vpack.c.b16 %v1036, %v1034
        %v1149 = vpack.c.b16 %v1037, %v1035
        %v1150 = vpack.c.b16 %v1040, %v1038
        %v1151 = vpack.c.b16 %v1041, %v1039
        %v1152 = vpack.c.b16 %v1044, %v1042
        %v1153 = vpack.c.b16 %v1045, %v1043
        %v1154 = vpack.c.b16 %v1048, %v1046
        %v1155 = vpack.c.b16 %v1049, %v1047
        %v1156 = vpack.c.b16 %v1052, %v1050
        %v1157 = vpack.c.b16 %v1053, %v1051
        %v1158 = vpack.c.b16 %v1056, %v1054
        %v1159 = vpack.c.b16 %v1057, %v1055
        %v1160 = vpack.c.b16 %v1060, %v1058
        %v1161 = vpack.c.b16 %v1061, %v1059
        %v1162 = vpack.c.b16 %v1064, %v1062
        %v1163 = vpack.c.b16 %v1065, %v1063
        %v1164 = vpack.c.b16 %v1068, %v1066
        %v1165 = vpack.c.b16 %v1069, %v1067
        %1262 = vmatprep.subr.bf16.mxu0 %v1071
        %1263 = vmatpush1.bf16.msra.mxu0 %v1070
        %1264 = vmatprep.subr.bf16.mxu0 %v1073
        %1265 = vmatpush1.bf16.msra.mxu0 %v1072
        %1266 = vmatprep.subr.bf16.mxu0 %v1075
        %1267 = vmatpush1.bf16.msra.mxu0 %v1074
        %1268 = vmatprep.subr.bf16.mxu0 %v1077
        %1269 = vmatpush1.bf16.msra.mxu0 %v1076
        %1270 = vmatprep.subr.bf16.mxu0 %v1079
        %1271 = vmatpush1.bf16.msra.mxu0 %v1078
        %1272 = vmatprep.subr.bf16.mxu0 %v1081
        %1273 = vmatpush1.bf16.msra.mxu0 %v1080
        %1274 = vmatprep.subr.bf16.mxu0 %v1083
        %1275 = vmatpush1.bf16.msra.mxu0 %v1082
        %1276 = vmatprep.subr.bf16.mxu0 %v1085
        %1277 = vmatpush1.bf16.msra.mxu0 %v1084
        %1278 = vmatprep.subr.bf16.mxu0 %v1087
        %1279 = vmatpush1.bf16.msra.mxu0 %v1086
        %1280 = vmatprep.subr.bf16.mxu0 %v1089
        %1281 = vmatpush1.bf16.msra.mxu0 %v1088
        %1282 = vmatprep.subr.bf16.mxu0 %v1091
        %1283 = vmatpush1.bf16.msra.mxu0 %v1090
        %1284 = vmatprep.subr.bf16.mxu0 %v1093
        %1285 = vmatpush1.bf16.msra.mxu0 %v1092
        %1286 = vmatprep.subr.bf16.mxu0 %v1095
        %1287 = vmatpush1.bf16.msra.mxu0 %v1094
        %1288 = vmatprep.subr.bf16.mxu0 %v1097
        %1289 = vmatpush1.bf16.msra.mxu0 %v1096
        %1290 = vmatprep.subr.bf16.mxu0 %v1099
        %1291 = vmatpush1.bf16.msra.mxu0 %v1098
        %1292 = vmatprep.subr.bf16.mxu0 %v1101
        %1293 = vmatpush1.bf16.msra.mxu0 %v1100
        %1294 = vmatprep.mubr.bf16.mxu0 %v657
        %1295 = vmatmul.mubr.bf16.gmra.mrb[0].mxu0 %v656
        %v1296 = vpop.f32.mrb[0].mxu0
        %v1297 = vadd.f32 %v775, %v1296
        %v1298 = vpop.f32.mrb[0].mxu0
        %v1299 = vadd.f32 %v779, %v1298
        %v1300 = vpop.f32.mrb[0].mxu0
        %v1301 = vadd.f32 %v775, %v1300
        %v1302 = vpop.f32.mrb[0].mxu0
        %v1303 = vadd.f32 %v779, %v1302
        %1304 = vmatprep.mubr.bf16.mxu0 %v663
        %1305 = vmatmul.mubr.bf16.gmra.mrb[0].mxu0 %v662
        %v1306 = vpop.f32.mrb[0].mxu0
        %v1307 = vadd.f32 %v775, %v1306
        %v1308 = vpop.f32.mrb[0].mxu0
        %v1309 = vadd.f32 %v779, %v1308
        %v1310 = vpop.f32.mrb[0].mxu0
        %v1311 = vadd.f32 %v775, %v1310
        %v1312 = vpop.f32.mrb[0].mxu0
        %v1313 = vadd.f32 %v779, %v1312
        %1314 = vmatprep.mubr.bf16.mxu0 %v669
        %1315 = vmatmul.mubr.bf16.gmra.mrb[0].mxu0 %v668
        %v1316 = vpop.f32.mrb[0].mxu0
        %v1317 = vadd.f32 %v775, %v1316
        %v1318 = vpop.f32.mrb[0].mxu0
        %v1319 = vadd.f32 %v779, %v1318
        %v1320 = vpop.f32.mrb[0].mxu0
        %v1321 = vadd.f32 %v775, %v1320
        %v1322 = vpop.f32.mrb[0].mxu0
        %v1323 = vadd.f32 %v779, %v1322
        %1324 = vdwg.mxu0
        %1325 = vmatprep.subr.bf16.mxu0 %v1103
        %1326 = vmatpush1.bf16.msra.mxu0 %v1102
        %1327 = vmatprep.subr.bf16.mxu0 %v1105
        %1328 = vmatpush1.bf16.msra.mxu0 %v1104
        %1329 = vmatprep.subr.bf16.mxu0 %v1107
        %1330 = vmatpush1.bf16.msra.mxu0 %v1106
        %1331 = vmatprep.subr.bf16.mxu0 %v1109
        %1332 = vmatpush1.bf16.msra.mxu0 %v1108
        %1333 = vmatprep.subr.bf16.mxu0 %v1111
        %1334 = vmatpush1.bf16.msra.mxu0 %v1110
        %1335 = vmatprep.subr.bf16.mxu0 %v1113
        %1336 = vmatpush1.bf16.msra.mxu0 %v1112
        %1337 = vmatprep.subr.bf16.mxu0 %v1115
        %1338 = vmatpush1.bf16.msra.mxu0 %v1114
        %1339 = vmatprep.subr.bf16.mxu0 %v1117
        %1340 = vmatpush1.bf16.msra.mxu0 %v1116
        %1341 = vmatprep.subr.bf16.mxu0 %v1119
        %1342 = vmatpush1.bf16.msra.mxu0 %v1118
        %1343 = vmatprep.subr.bf16.mxu0 %v1121
        %1344 = vmatpush1.bf16.msra.mxu0 %v1120
        %1345 = vmatprep.subr.bf16.mxu0 %v1123
        %1346 = vmatpush1.bf16.msra.mxu0 %v1122
        %1347 = vmatprep.subr.bf16.mxu0 %v1125
        %1348 = vmatpush1.bf16.msra.mxu0 %v1124
        %1349 = vmatprep.subr.bf16.mxu0 %v1127
        %1350 = vmatpush1.bf16.msra.mxu0 %v1126
        %1351 = vmatprep.subr.bf16.mxu0 %v1129
        %1352 = vmatpush1.bf16.msra.mxu0 %v1128
        %1353 = vmatprep.subr.bf16.mxu0 %v1131
        %1354 = vmatpush1.bf16.msra.mxu0 %v1130
        %1355 = vmatprep.subr.bf16.mxu0 %v1133
        %1356 = vmatpush1.bf16.msra.mxu0 %v1132
        %1357 = vmatprep.mubr.bf16.mxu0 %v659
        %1358 = vmatmul.mubr.bf16.gmra.mrb[0].mxu0 %v658
        %v1359 = vpop.f32.mrb[0].mxu0
        %v1360 = vadd.f32 %v1297, %v1359
        %v1361 = vpop.f32.mrb[0].mxu0
        %v1362 = vadd.f32 %v1299, %v1361
        %v1363 = vpop.f32.mrb[0].mxu0
        %v1364 = vadd.f32 %v1301, %v1363
        %v1365 = vpop.f32.mrb[0].mxu0
        %v1366 = vadd.f32 %v1303, %v1365
        %1367 = vmatprep.mubr.bf16.mxu0 %v665
        %1368 = vmatmul.mubr.bf16.gmra.mrb[0].mxu0 %v664
        %v1369 = vpop.f32.mrb[0].mxu0
        %v1370 = vadd.f32 %v1307, %v1369
        %v1371 = vpop.f32.mrb[0].mxu0
        %v1372 = vadd.f32 %v1309, %v1371
        %v1373 = vpop.f32.mrb[0].mxu0
        %v1374 = vadd.f32 %v1311, %v1373
        %v1375 = vpop.f32.mrb[0].mxu0
        %v1376 = vadd.f32 %v1313, %v1375
        %1377 = vmatprep.mubr.bf16.mxu0 %v671
        %1378 = vmatmul.mubr.bf16.gmra.mrb[0].mxu0 %v670
        %v1379 = vpop.f32.mrb[0].mxu0
        %v1380 = vadd.f32 %v1317, %v1379
        %v1381 = vpop.f32.mrb[0].mxu0
        %v1382 = vadd.f32 %v1319, %v1381
        %v1383 = vpop.f32.mrb[0].mxu0
        %v1384 = vadd.f32 %v1321, %v1383
        %v1385 = vpop.f32.mrb[0].mxu0
        %v1386 = vadd.f32 %v1323, %v1385
        %1387 = vdwg.mxu0
        %1388 = vmatprep.subr.bf16.mxu0 %v1135
        %1389 = vmatpush1.bf16.msra.mxu0 %v1134
        %1390 = vmatprep.subr.bf16.mxu0 %v1137
        %1391 = vmatpush1.bf16.msra.mxu0 %v1136
        %1392 = vmatprep.subr.bf16.mxu0 %v1139
        %1393 = vmatpush1.bf16.msra.mxu0 %v1138
        %1394 = vmatprep.subr.bf16.mxu0 %v1141
        %1395 = vmatpush1.bf16.msra.mxu0 %v1140
        %1396 = vmatprep.subr.bf16.mxu0 %v1143
        %1397 = vmatpush1.bf16.msra.mxu0 %v1142
        %1398 = vmatprep.subr.bf16.mxu0 %v1145
        %1399 = vmatpush1.bf16.msra.mxu0 %v1144
        %1400 = vmatprep.subr.bf16.mxu0 %v1147
        %1401 = vmatpush1.bf16.msra.mxu0 %v1146
        %1402 = vmatprep.subr.bf16.mxu0 %v1149
        %1403 = vmatpush1.bf16.msra.mxu0 %v1148
        %1404 = vmatprep.subr.bf16.mxu0 %v1151
        %1405 = vmatpush1.bf16.msra.mxu0 %v1150
        %1406 = vmatprep.subr.bf16.mxu0 %v1153
        %1407 = vmatpush1.bf16.msra.mxu0 %v1152
        %1408 = vmatprep.subr.bf16.mxu0 %v1155
        %1409 = vmatpush1.bf16.msra.mxu0 %v1154
        %1410 = vmatprep.subr.bf16.mxu0 %v1157
        %1411 = vmatpush1.bf16.msra.mxu0 %v1156
        %1412 = vmatprep.subr.bf16.mxu0 %v1159
        %1413 = vmatpush1.bf16.msra.mxu0 %v1158
        %1414 = vmatprep.subr.bf16.mxu0 %v1161
        %1415 = vmatpush1.bf16.msra.mxu0 %v1160
        %1416 = vmatprep.subr.bf16.mxu0 %v1163
        %1417 = vmatpush1.bf16.msra.mxu0 %v1162
        %1418 = vmatprep.subr.bf16.mxu0 %v1165
        %1419 = vmatpush1.bf16.msra.mxu0 %v1164
        %1420 = vmatprep.mubr.bf16.mxu0 %v661
        %1421 = vmatmul.mubr.bf16.gmra.mrb[0].mxu0 %v660
        %v1422 = vpop.f32.mrb[0].mxu0
        %v1423 = vadd.f32 %v1360, %v1422
        %v1424 = vpop.f32.mrb[0].mxu0
        %v1425 = vadd.f32 %v1362, %v1424
        %v1426 = vpop.f32.mrb[0].mxu0
        %v1427 = vadd.f32 %v1364, %v1426
        %v1428 = vpop.f32.mrb[0].mxu0
        %v1429 = vadd.f32 %v1366, %v1428
        %1430 = vmatprep.mubr.bf16.mxu0 %v667
        %1431 = vmatmul.mubr.bf16.gmra.mrb[0].mxu0 %v666
        %v1432 = vpop.f32.mrb[0].mxu0
        %v1433 = vadd.f32 %v1370, %v1432
        %v1434 = vpop.f32.mrb[0].mxu0
        %v1435 = vadd.f32 %v1372, %v1434
        %v1436 = vpop.f32.mrb[0].mxu0
        %v1437 = vadd.f32 %v1374, %v1436
        %v1438 = vpop.f32.mrb[0].mxu0
        %v1439 = vadd.f32 %v1376, %v1438
        %1440 = vmatprep.mubr.bf16.mxu0 %v673
        %1441 = vmatmul.mubr.bf16.gmra.mrb[0].mxu0 %v672
        %v1442 = vpop.f32.mrb[0].mxu0
        %v1443 = vadd.f32 %v1380, %v1442
        %v1444 = vpop.f32.mrb[0].mxu0
        %v1445 = vadd.f32 %v1382, %v1444
        %v1446 = vpop.f32.mrb[0].mxu0
        %v1447 = vadd.f32 %v1384, %v1446
        %v1448 = vpop.f32.mrb[0].mxu0
        %v1449 = vadd.f32 %v1386, %v1448
        %1450 = vdwg.mxu0
        %v1451 = vmax.f32 %v1423, 0.0
        %v1452 = vmax.f32 %v1425, 0.0
        %v1453 = vmax.f32 %v1427, 0.0
        %v1454 = vmax.f32 %v1429, 0.0
        %v1455 = vmax.f32 %v1433, 0.0
        %v1456 = vmax.f32 %v1435, 0.0
        %v1457 = vmax.f32 %v1437, 0.0
        %v1458 = vmax.f32 %v1439, 0.0
        %v1459 = vmax.f32 %v1443, 0.0
        %v1460 = vmax.f32 %v1445, 0.0
        %v1461 = vmax.f32 %v1447, 0.0
        %v1462 = vmax.f32 %v1449, 0.0
        %v1463 = vadd.s32 %v617, 8
        %v1464 = vld [vmem:[#allocation13] sm:$0x3]
        %v1465 = vlaneseq
        %v1466 = vshrl.u32 %v1465, 7
        %v1467 = vsub.s32 0, %v1466
        %v1468 = vrot.slane %v1464, %v1467
        %v1469 = vlaneseq
        %v1470 = vshrl.u32 %v1469, 7
        %v1471 = vsub.s32 1, %v1470
        %v1472 = vrot.slane %v1464, %v1471
        %vm1473 = vcmp.lt.s32.totalorder %v617, %v1468
        %vm1474 = vcmp.lt.s32.totalorder %v617, %v1472
        %vm1475 = vcmp.lt.s32.totalorder %v1463, %v1468
        %vm1476 = vcmp.lt.s32.totalorder %v1463, %v1472
        %v1477 = vsel %vm1473, 1, 0
        %v1478 = vsel %vm1474, 1, 0
        %v1479 = vsel %vm1475, 1, 0
        %v1480 = vsel %vm1476, 1, 0
        %vm1481 = vcmp.eq.s32.totalorder %v1477, 1
        %vm1482 = vcmp.eq.s32.totalorder %v1478, 1
        %vm1483 = vcmp.eq.s32.totalorder %v1479, 1
        %vm1484 = vcmp.eq.s32.totalorder %v1480, 1
        %v1485 = vsel %vm1481, %v1451, -1e+30
        %v1486 = vsel %vm1482, %v1452, -1e+30
        %v1487 = vsel %vm1483, %v1453, -1e+30
        %v1488 = vsel %vm1484, %v1454, -1e+30
        %v1489 = vsel %vm1481, %v1455, -1e+30
        %v1490 = vsel %vm1482, %v1456, -1e+30
        %v1491 = vsel %vm1483, %v1457, -1e+30
        %v1492 = vsel %vm1484, %v1458, -1e+30
        %v1493 = vsel %vm1481, %v1459, -1e+30
        %v1494 = vsel %vm1482, %v1460, -1e+30
        %v1495 = vsel %vm1483, %v1461, -1e+30
        %v1496 = vsel %vm1484, %v1462, -1e+30
        %v1497 = vmax.f32 %v1485, %v1487
        %v1498 = vrot.slane %v1497, 4
        %v1499 = vmax.f32 %v1497, %v1498
        %v1500 = vrot.slane %v1499, 2
        %v1501 = vmax.f32 %v1499, %v1500
        %v1502 = vrot.slane %v1501, 1
        %v1503 = vmax.f32 %v1501, %v1502
        %v1504 = vmax.f32 %v1486, %v1488
        %v1505 = vrot.slane %v1504, 4
        %v1506 = vmax.f32 %v1504, %v1505
        %v1507 = vrot.slane %v1506, 2
        %v1508 = vmax.f32 %v1506, %v1507
        %v1509 = vrot.slane %v1508, 1
        %v1510 = vmax.f32 %v1508, %v1509
        %v1511 = vmax.f32 %v1489, %v1491
        %v1512 = vrot.slane %v1511, 4
        %v1513 = vmax.f32 %v1511, %v1512
        %v1514 = vrot.slane %v1513, 2
        %v1515 = vmax.f32 %v1513, %v1514
        %v1516 = vrot.slane %v1515, 1
        %v1517 = vmax.f32 %v1515, %v1516
        %v1518 = vmax.f32 %v1490, %v1492
        %v1519 = vrot.slane %v1518, 4
        %v1520 = vmax.f32 %v1518, %v1519
        %v1521 = vrot.slane %v1520, 2
        %v1522 = vmax.f32 %v1520, %v1521
        %v1523 = vrot.slane %v1522, 1
        %v1524 = vmax.f32 %v1522, %v1523
        %v1525 = vmax.f32 %v1493, %v1495
        %v1526 = vrot.slane %v1525, 4
        %v1527 = vmax.f32 %v1525, %v1526
        %v1528 = vrot.slane %v1527, 2
        %v1529 = vmax.f32 %v1527, %v1528
        %v1530 = vrot.slane %v1529, 1
        %v1531 = vmax.f32 %v1529, %v1530
        %v1532 = vmax.f32 %v1494, %v1496
        %v1533 = vrot.slane %v1532, 4
        %v1534 = vmax.f32 %v1532, %v1533
        %v1535 = vrot.slane %v1534, 2
        %v1536 = vmax.f32 %v1534, %v1535
        %v1537 = vrot.slane %v1536, 1
        %v1538 = vmax.f32 %v1536, %v1537
        %v1545 = vcombine.low %v1503, %v1510
        %v1546 = vcombine.low %v1517, %v1524
        %v1547 = vcombine.low %v1531, %v1538
        %v1548 = vrot.slane %v1546, 7
        %vm1549 = vcmask 1041409
        %v1550 = vsel %vm1549, %v1548, %v1545
        %vm1551 = vcmask 1045509
        %v1552 = vsel %vm1551, %v1548, %v1550
        %v1553 = vrot.slane %v1547, 6
        %vm1554 = vcmask 1042434
        %v1555 = vsel %vm1554, %v1553, %v1552
        %vm1556 = vcmask 1046534
        %v1557 = vsel %vm1556, %v1553, %v1555
        %1559 = vst [vmem:[%s404] sm:$0x77] %v1557
        %s1560 = sand.u32 %s194, 1
        %s1561 = scalar_lea.sflag [#allocation4], %s1560
        %s1562 = sand.u32 %s194, 1
        %s1563 = smul.addr %s1562, 8
        %s1564 = scalar_lea.vmem [#allocation14], %s1563
        // Predicated region
        $region77: #{tpu_custom_call.1} parent=47 // pred_check
          %p1565 = pneg %p204
        $region78: #{tpu_custom_call.1} parent=47 // pred_check_branch
          %1567 = sbr.rel (%p1565) target = $region80
        $region79: #{tpu_custom_call.1} parent=47 // pred_region
          %s1569 = ssub.s32 128, 128
          %1570 = vsyncadd %s1561, %s1569
          %s1571 = smul.addr %s29, 2
          %s1572 = smul.addr %s1571, 64
          %s1573 = scalar_lea.hbm %s7, %s1572
          %s1575 = sshll.u32 %s1564, 4
          %s1576 = int_to_ptr.vmem [resolvable:$true] %s1575
          %1578 = dma.vmem_to_hbm [thread:$0]  %s1576, 128, %s1573, %s1561
        $region80: #{tpu_custom_call.1} parent=47 // pred_fallthru
          _
      $region48: #{tpu_custom_call.1} parent=5 // pred_fallthru
        _
      %p1579 = scmp.le.s32.totalorder 2, %s24
      // Predicated region
      $region81: #{tpu_custom_call.1} parent=5 // pred_check
        %p1580 = pneg %p1579
      $region82: #{tpu_custom_call.1} parent=5 // pred_check_branch
        %1582 = sbr.rel (%p1580) target = $region84
      $region83: #{tpu_custom_call.1} parent=5 // pred_region
        %s1583 = ssub.s32 %s24, 2
        // Predicated region
        $region85: #{tpu_custom_call.1} parent=83 // pred_check
          %p1584 = pneg %p210
        $region86: #{tpu_custom_call.1} parent=83 // pred_check_branch
          %1586 = sbr.rel (%p1584) target = $region88
        $region87: #{tpu_custom_call.1} parent=83 // pred_region
          %s1587 = sand.u32 %s195, 1
          %s1588 = scalar_lea.sflag [#allocation4], %s1587
          %s1589 = sand.u32 %s195, 1
          %s1590 = smul.addr %s1589, 8
          %s1591 = scalar_lea.vmem [#allocation14], %s1590
          %1592 = dma.done %s1588, 128
        $region88: #{tpu_custom_call.1} parent=83 // pred_fallthru
          _
      $region84: #{tpu_custom_call.1} parent=5 // pred_fallthru
        _
    $region6: #{tpu_custom_call.1} parent=1 // loop_footer
      %s28 = sadd.s32 1, %s24
    $region7: #{tpu_custom_call.1} parent=1 // loop_footer_branch
      %23 = sbr.rel target = $region3
    $region8: #{tpu_custom_call.1} parent=1 // loop_exit
      _
    %1593 = vsyncpa [#allocation3], 1
    %s1594 = scalar_lea.sflag [#allocation3], 1
    %1595 = vsyncpa %s1594, 1
    %1596 = vsyncpa [#allocation6], 1
    %s1597 = scalar_lea.sflag [#allocation6], 1
    %1598 = vsyncpa %s1597, 1
    %1599 = vsyncpa [#allocation9], 1
    %1600 = vsyncpa [#allocation12], 1
    %1601 = vsyncpa [#allocation4], 1
    %s1602 = scalar_lea.sflag [#allocation4], 1
    %1603 = vsyncpa %s1602, 1

</llo_original>
